<compile_context>
chip_gen: v6e
topology: v6e:2x2x1
jax: 0.10.0
libtpu: 0.0.40
codegen_flags: <defaults>
</compile_context>

<pallas_src>
import jax
import jax.numpy as jnp
from jax.experimental import pallas as pl
from jax.experimental.pallas import tpu as pltpu


def _classifier_kernel(x_ref, s_ref, w_ref, b_ref, o_ref, acc_ref):
    """Fused base(GAP) -> dropout -> linear.

    x_ref   : VMEM (bt, C, hwt)  -- streamed feature-map tile (native layout)
    s_ref   : VMEM (bt, C)  f32  -- folded (keep_mask / (1-p) / HW) scale
    w_ref   : VMEM (C, NCP) f32  -- logits weight, transposed + lane-padded
    b_ref   : VMEM (1, NCP) f32  -- logits bias, lane-padded
    o_ref   : VMEM (bt, NCP) f32 -- output logits (lane-dense, padded)
    acc_ref : VMEM (bt, C)  f32  -- GAP partial-sum accumulator
    """
    j = pl.program_id(1)

    @pl.when(j == 0)
    def _():
        acc_ref[...] = jnp.zeros_like(acc_ref)

    # Partial GAP over this spatial tile: reduce the lane (spatial) axis.
    # dtype=f32 fuses the widening into the reduce (no full widened tile copy).
    acc_ref[...] += jnp.sum(x_ref[...], axis=-1, dtype=jnp.float32)

    @pl.when(j == pl.num_programs(1) - 1)
    def _():
        # One fused scale applies the 1/HW mean and the inverted-dropout mask.
        feats = acc_ref[...] * s_ref[...]                          # (bt, C)
        logits = jnp.dot(feats, w_ref[...],
                         preferred_element_type=jnp.float32)       # (bt, NCP)
        o_ref[...] = logits + b_ref[...]


def _pick_tiles(B, C, HW, itemsize, x_budget_bytes):
    """Pick (bt, hwt) for the (bt, C, hwt) x tile.

    hwt: prefer the full HW (contiguous DMA per batch row, spatial grid axis
         collapses to 1); otherwise the largest 128-multiple divisor of HW.
    bt:  largest divisor of B whose double-buffered x tile fits the budget,
         capped at B // 2 so the "parallel" batch axis keeps >= 2 blocks
         (both v7x TensorCores get work).  Prefer multiples of 8 so the
         (bt, C) / (bt, NCP) tiles stay sublane-aligned.
    """
    hwt_cands = [HW]
    h = (HW // 128) * 128
    while h >= 128:
        if h != HW and HW % h == 0:
            hwt_cands.append(h)
        h -= 128

    bt_cap = max(1, B // 2)
    b_divs = [d for d in range(bt_cap, 0, -1) if B % d == 0]

    for hwt in hwt_cands:
        per_buf = C * hwt * itemsize
        max_bt = x_budget_bytes // (2 * per_buf)
        if max_bt < 1:
            continue
        fitting = [d for d in b_divs if d <= max_bt]
        if not fitting:
            continue
        aligned = [d for d in fitting if d % 8 == 0]
        return (aligned[0] if aligned else fitting[0]), hwt

    # Degenerate: even a (1, C, 128) tile exceeds the budget.
    return 1, (128 if HW % 128 == 0 else HW)


def classifier_forward(x_nchw, label, w, b, *, key=None, train=False, p=0.5,
                       bt=None, hwt=None, vmem_limit_bytes=None):
    """JAX wrapper. `label` is accepted for API fidelity but unused (as in PyTorch)."""
    del label
    B, C, H, W = x_nchw.shape
    NC, F = w.shape
    assert F == C, "feature_dim must equal channel count of the GAP base"
    HW = H * W

    # Native layout: (B, C, HW) is a free reshape of NCHW (no HBM pass).
    x3 = x_nchw.reshape(B, C, HW)
    itemsize = jnp.dtype(x3.dtype).itemsize

    # Generation-aware VMEM budget.  v7x: 64 MiB physical -> ~48 MiB limit;
    # v5e/v6e: 128 MiB physical -> 96 MiB limit (raises the 16/32 MiB default
    # scoped limits so big tiles actually pipeline).
    if vmem_limit_bytes is None:
        try:
            phys = int(pltpu.get_tpu_info().vmem_capacity_bytes)
        except Exception:
            phys = 64 * 1024 * 1024          # conservative: assume v7x
        vmem_limit_bytes = min(int(phys * 0.75), 96 * 1024 * 1024)
    # Headroom for the (small) scale/weight/bias/output buffers + scratch.
    x_budget = int(vmem_limit_bytes * 0.6)

    if bt is None or hwt is None:
        abt, ahwt = _pick_tiles(B, C, HW, itemsize, x_budget)
        bt = abt if bt is None else bt
        hwt = ahwt if hwt is None else hwt

    # TODO(synk): generalize to ragged spatial tiles by masking the last tile
    #             before the GAP sum instead of asserting even tiling.
    assert B % bt == 0 and HW % hwt == 0, "wrapper assumes even tiling"

    # Lane-dense output: pad num_classes up to a multiple of 128.
    NCP = ((NC + 127) // 128) * 128

    # Fold GAP mean and inverted-dropout scaling into one per-feature scale.
    inv_hw = 1.0 / float(HW)
    if train:
        assert key is not None, "train mode requires a PRNG key"
        keep = jax.random.bernoulli(key, 1.0 - p, (B, C))
        scale = keep.astype(jnp.float32) * (inv_hw / (1.0 - p))
    else:
        scale = jnp.full((B, C), inv_hw, dtype=jnp.float32)

    w_t = jnp.zeros((C, NCP), jnp.float32).at[:, :NC].set(w.T.astype(jnp.float32))
    b2 = jnp.zeros((1, NCP), jnp.float32).at[:, :NC].set(
        b.astype(jnp.float32)[None, :])

    grid = (B // bt, HW // hwt)

    cost = pl.CostEstimate(
        flops=B * HW * C + 2 * B * C * NCP,
        transcendentals=0,
        bytes_accessed=(B * HW * C * itemsize       # x (dominant)
                        + B * C * 4                 # scale
                        + C * NCP * 4 + NCP * 4     # weights + bias
                        + B * NCP * 4),             # output
    )

    out_padded = pl.pallas_call(
        _classifier_kernel,
        out_shape=jax.ShapeDtypeStruct((B, NCP), jnp.float32),
        grid_spec=pltpu.PrefetchScalarGridSpec(
            num_scalar_prefetch=0,
            grid=grid,
            in_specs=[
                pl.BlockSpec((bt, C, hwt), lambda i, j: (i, 0, j)),
                pl.BlockSpec((bt, C), lambda i, j: (i, 0)),
                pl.BlockSpec((C, NCP), lambda i, j: (0, 0)),
                pl.BlockSpec((1, NCP), lambda i, j: (0, 0)),
            ],
            out_specs=pl.BlockSpec((bt, NCP), lambda i, j: (i, 0)),
            scratch_shapes=[pltpu.VMEM((bt, C), jnp.float32)],
        ),
        compiler_params=pltpu.CompilerParams(
            dimension_semantics=("parallel", "arbitrary"),
            vmem_limit_bytes=vmem_limit_bytes,
        ),
        cost_estimate=cost,
    )(x3, scale, w_t, b2)

    return out_padded[:, :NC]


if __name__ == "__main__":
    # Small, deterministic setup (TPU-friendly: C multiple of 128).
    B, C, H, W = 16, 128, 16, 16             # NCHW input; feature_dim == C
    feature_dim, num_classes = C, 16

    key = jax.random.PRNGKey(0)
    kx, kw, kb, kl, kd = jax.random.split(key, 5)

    x = jax.random.normal(kx, (B, C, H, W), dtype=jnp.float32)
    label = jax.random.randint(kl, (B,), 0, num_classes)

    # nn.Linear(feature_dim, num_classes) init: U(-1/sqrt(fan_in), +1/sqrt(fan_in)).
    bound = 1.0 / (feature_dim ** 0.5)
    w = jax.random.uniform(kw, (num_classes, feature_dim),
                           minval=-bound, maxval=bound, dtype=jnp.float32)
    b = jax.random.uniform(kb, (num_classes,),
                           minval=-bound, maxval=bound, dtype=jnp.float32)

    feats_ref = jnp.mean(x, axis=(2, 3))                          # (B, C) GAP

    # --- Eval mode: dropout is identity -----------------------------------
    out_eval = jax.block_until_ready(
        classifier_forward(x, label, w, b, train=False))
    ref_eval = feats_ref @ w.T + b[None, :]
    assert out_eval.shape == (B, num_classes)
    assert jnp.allclose(out_eval, ref_eval, atol=1e-3, rtol=1e-3), "eval mismatch"

    # --- Train mode: inverted dropout with p = 0.5 -------------------------
    p = 0.5
    out_train = jax.block_until_ready(
        classifier_forward(x, label, w, b, key=kd, train=True, p=p))
    keep = jax.random.bernoulli(kd, 1.0 - p, (B, C)).astype(jnp.float32)
    ref_train = (feats_ref * keep / (1.0 - p)) @ w.T + b[None, :]
    assert out_train.shape == (B, num_classes)
    assert jnp.allclose(out_train, ref_train, atol=1e-3, rtol=1e-3), "train mismatch"
    assert bool(jnp.all(jnp.isfinite(out_train)))

    print("KERNEL_OK")
</pallas_src>

<mosaic_0001>
module attributes {stable_mosaic.version = 11 : i64} {
  func.func @_classifier_kernel(%arg0: i32, %arg1: i32, %arg2: memref<8x128x256xf32, #tpu.memory_space<vmem>>, %arg3: memref<8x128xf32, #tpu.memory_space<vmem>>, %arg4: memref<128x128xf32, #tpu.memory_space<vmem>>, %arg5: memref<1x128xf32, #tpu.memory_space<vmem>>, %arg6: memref<8x128xf32, #tpu.memory_space<vmem>>, %arg7: memref<8x128xf32, #tpu.memory_space<vmem>>) attributes {dimension_semantics = [#tpu.dimension_semantics<parallel>, #tpu.dimension_semantics<arbitrary>], iteration_bounds = array<i64: 2, 1>, scalar_prefetch = 0 : i64, scratch_operands = 1 : i64, tpu.core_type = #tpu.core_type<tc>, window_params = [{transform_indices = @transform_0, window_bounds = array<i64: 8, 128, 256>}, {transform_indices = @transform_1, window_bounds = array<i64: 8, 128>}, {pipeline_mode = #tpu.pipeline_mode<synchronous>, transform_indices = @transform_2, window_bounds = array<i64: 128, 128>}, {pipeline_mode = #tpu.pipeline_mode<synchronous>, transform_indices = @transform_3, window_bounds = array<i64: 1, 128>}, {transform_indices = @transform_4, window_bounds = array<i64: 8, 128>}]} {
    %c0_i32 = arith.constant 0 : i32
    %0 = arith.cmpi eq, %arg1, %c0_i32 : i32
    %1 = arith.extui %0 : i1 to i32
    %c0_i32_0 = arith.constant 0 : i32
    %2 = arith.cmpi ne, %1, %c0_i32_0 : i32
    scf.if %2 {
      %cst_9 = arith.constant 0.000000e+00 : f32
      %11 = vector.broadcast %cst_9 : f32 to vector<8x128xf32>
      %c0_10 = arith.constant 0 : index
      %c0_11 = arith.constant 0 : index
      %12 = vector.load %arg7[%c0_10, %c0_11] : memref<8x128xf32, #tpu.memory_space<vmem>>, vector<8x128xf32>
      tpu.vector_store %arg7[%c0_10, %c0_11], %11 {strides = array<i32>} : memref<8x128xf32, #tpu.memory_space<vmem>>, vector<8x128xf32>,
    } else {
    }
    %c0 = arith.constant 0 : index
    %c0_1 = arith.constant 0 : index
    %3 = vector.load %arg7[%c0, %c0_1] : memref<8x128xf32, #tpu.memory_space<vmem>>, vector<8x128xf32>
    %c0_2 = arith.constant 0 : index
    %c0_3 = arith.constant 0 : index
    %c0_4 = arith.constant 0 : index
    %4 = vector.load %arg2[%c0_2, %c0_3, %c0_4] : memref<8x128x256xf32, #tpu.memory_space<vmem>>, vector<8x128x256xf32>
    %cst = arith.constant dense<0.000000e+00> : vector<8x128xf32>
    %5 = vector.multi_reduction <add>, %4, %cst [2] : vector<8x128x256xf32> to vector<8x128xf32>
    %6 = arith.addf %3, %5 : vector<8x128xf32>
    %c0_5 = arith.constant 0 : index
    %c0_6 = arith.constant 0 : index
    %7 = vector.load %arg7[%c0_5, %c0_6] : memref<8x128xf32, #tpu.memory_space<vmem>>, vector<8x128xf32>
    tpu.vector_store %arg7[%c0_5, %c0_6], %6 {strides = array<i32>} : memref<8x128xf32, #tpu.memory_space<vmem>>, vector<8x128xf32>,
    %c0_i32_7 = arith.constant 0 : i32
    %8 = arith.cmpi eq, %arg1, %c0_i32_7 : i32
    %9 = arith.extui %8 : i1 to i32
    %c0_i32_8 = arith.constant 0 : i32
    %10 = arith.cmpi ne, %9, %c0_i32_8 : i32
    scf.if %10 {
      %c0_9 = arith.constant 0 : index
      %c0_10 = arith.constant 0 : index
      %11 = vector.load %arg7[%c0_9, %c0_10] : memref<8x128xf32, #tpu.memory_space<vmem>>, vector<8x128xf32>
      %c0_11 = arith.constant 0 : index
      %c0_12 = arith.constant 0 : index
      %12 = vector.load %arg3[%c0_11, %c0_12] : memref<8x128xf32, #tpu.memory_space<vmem>>, vector<8x128xf32>
      %13 = arith.mulf %11, %12 : vector<8x128xf32>
      %c0_13 = arith.constant 0 : index
      %c0_14 = arith.constant 0 : index
      %14 = vector.load %arg4[%c0_13, %c0_14] : memref<128x128xf32, #tpu.memory_space<vmem>>, vector<128x128xf32>
      %cst_15 = arith.constant dense<0.000000e+00> : vector<8x128xf32>
      %15 = tpu.matmul %13, %14, %cst_15 {dimension_numbers = #tpu.dot_dimension_numbers<[1], [0], [0], [1], [0, 0, 1, 1], [], []>} : vector<8x128xf32>, vector<128x128xf32>, vector<8x128xf32> -> vector<8x128xf32>
      %c0_16 = arith.constant 0 : index
      %c0_17 = arith.constant 0 : index
      %16 = vector.load %arg5[%c0_16, %c0_17] : memref<1x128xf32, #tpu.memory_space<vmem>>, vector<1x128xf32>
      %17 = vector.broadcast %16 : vector<1x128xf32> to vector<8x128xf32>
      %18 = arith.addf %15, %17 : vector<8x128xf32>
      %c0_18 = arith.constant 0 : index
      %c0_19 = arith.constant 0 : index
      %19 = vector.load %arg6[%c0_18, %c0_19] : memref<8x128xf32, #tpu.memory_space<vmem>>, vector<8x128xf32>
      tpu.vector_store %arg6[%c0_18, %c0_19], %18 {strides = array<i32>} : memref<8x128xf32, #tpu.memory_space<vmem>>, vector<8x128xf32>,
    } else {
    }
    return
  }
  func.func @transform_0(%arg0: i32, %arg1: i32) -> (i32, i32, i32) {
    %c0_i32 = arith.constant 0 : i32
    %c0_i32_0 = arith.constant 0 : i32
    return %arg0, %c0_i32, %arg1 : i32, i32, i32
  }
  func.func @transform_1(%arg0: i32, %arg1: i32) -> (i32, i32) {
    %c0_i32 = arith.constant 0 : i32
    %c0_i32_0 = arith.constant 0 : i32
    return %arg0, %c0_i32 : i32, i32
  }
  func.func @transform_2(%arg0: i32, %arg1: i32) -> (i32, i32) {
    %c0_i32 = arith.constant 0 : i32
    %c0_i32_0 = arith.constant 0 : i32
    %c0_i32_1 = arith.constant 0 : i32
    return %c0_i32, %c0_i32_0 : i32, i32
  }
  func.func @transform_3(%arg0: i32, %arg1: i32) -> (i32, i32) {
    %c0_i32 = arith.constant 0 : i32
    %c0_i32_0 = arith.constant 0 : i32
    %c0_i32_1 = arith.constant 0 : i32
    return %c0_i32, %c0_i32_0 : i32, i32
  }
  func.func @transform_4(%arg0: i32, %arg1: i32) -> (i32, i32) {
    %c0_i32 = arith.constant 0 : i32
    %c0_i32_0 = arith.constant 0 : i32
    return %arg0, %c0_i32 : i32, i32
  }
}

</mosaic_0001>

<llo_original>
// kernel: tpu_custom_call.1
$region0: #{tpu_custom_call.1}
  #allocation0 [shape = 'u32[]', space=smem, size = 0x4, offset = 0x4, fixed_abs, tag = 'smem constant byte address 0x4 - core index']
  #allocation1 [shape = 'u32[144,128]{1,0:T(1,128)}', space=vmem, size = 0x12000, scoped, tag = 'internal scratch']
  #allocation2 [shape = 'f32[8,128]{1,0:T(8,128)}', space=vmem, size = 0x1000, scoped, tag = 'scratch operand']
  %s0 = inlined_call_operand.hbm [shape: f32[16,128,256], index: 0, kind: input, shape index: {}]
  %s1 = inlined_call_operand.hbm [shape: f32[16,128], index: 1, kind: input, shape index: {}]
  %s2 = inlined_call_operand.hbm [shape: f32[128,128], index: 2, kind: input, shape index: {}]
  %s3 = inlined_call_operand.hbm [shape: f32[1,128], index: 3, kind: input, shape index: {}]
  %s4 = inlined_call_operand.hbm [shape: f32[16,128], index: 4, kind: output, shape index: {}]
  %s5 = sld [smem:[#allocation0]]
  $region73: #{tpu_custom_call.1} parent=0
    _
  %s7 = ssub.s32 1, %s5
  %s8 = scalar_select 0, %s7, %s5
  $region1: #{tpu_custom_call.1} parent=0
    #allocation3 [shape = 'u8[2097152]{0}', space=vmem, size = 0x200000, scoped, tag = 'input window, operand 0']
    #allocation4 [shape = 's32[2]{0}', space=sflag, size = 0x8, scoped, tag = 'scoped memory for tpu_custom_call.1']
    #allocation5 [shape = 's32[2]{0}', space=sflag, size = 0x8, scoped, tag = 'scoped memory for tpu_custom_call.1']
    #allocation6 [shape = 'u8[8192]{0}', space=vmem, size = 0x2000, scoped, tag = 'input window, operand 1']
    #allocation7 [shape = 's32[2]{0}', space=sflag, size = 0x8, scoped, tag = 'scoped memory for tpu_custom_call.1']
    #allocation8 [shape = 'u8[65536]{0}', space=vmem, size = 0x10000, scoped, tag = 'input window, operand 2, single buffered']
    #allocation9 [shape = 'u8[512]{0}', space=vmem, size = 0x400, scoped, tag = 'input window, operand 3, single buffered']
    #allocation10 [shape = 's32[1]{0}', space=sflag, size = 0x4, scoped, tag = 'scoped memory for tpu_custom_call.1']
    #allocation11 [shape = 'u8[8192]{0}', space=vmem, size = 0x2000, scoped, tag = 'output window, operand 0']
    %9 = vsyncpa [#allocation4], 0
    %s10 = scalar_lea.sflag [#allocation4], 1
    %11 = vsyncpa %s10, 0
    %12 = vsyncpa [#allocation7], 0
    %s13 = scalar_lea.sflag [#allocation7], 1
    %14 = vsyncpa %s13, 0
    %15 = vsyncpa [#allocation10], 0
    %16 = vsyncpa [#allocation5], 0
    %s17 = scalar_lea.sflag [#allocation5], 1
    %18 = vsyncpa %s17, 0
    loop: start=0, step=1, limit=4
    $region2: #{tpu_custom_call.1} parent=1 // loop_pre_header
      _
    $region3: #{tpu_custom_call.1} parent=1 // loop_header
      %s20 = sphi 0, %s24
      %p21 = scmp.ge.s32.totalorder %s20, 4
      %s27 = sphi 0, %s39
      %s28 = sphi 0, %s35
      %s29 = sphi 0, %s27
      %s30 = sphi 0, %s28
      %s31 = sphi 0, %s29
      %s32 = sphi 0, %s30
      %s44 = sphi 0, %s46
      %s47 = sphi 0, %s44
      %s48 = sphi 0, %s47
      %s64 = sphi 0, %s48
      %s70 = sphi 0, %s72
      %s73 = sphi 0, %s70
      %s74 = sphi 0, %s73
      %s90 = sphi 0, %s74
      %s94 = sphi 0, %s94
      %s96 = sphi 0, %s94
      %s97 = sphi 0, %s96
      %s111 = sphi 0, %s97
      %s115 = sphi 0, %s115
      %s117 = sphi 0, %s115
      %s118 = sphi 0, %s117
      %s132 = sphi 0, %s118
      %s138 = sphi 0, %s140
      %s141 = sphi 0, %s138
      %s142 = sphi 0, %s141
      %s158 = sphi 0, %s142
    $region4: #{tpu_custom_call.1} parent=1 // loop_header_branch
      %23 = sbr.rel (%p21) target = $region8
    $region5: #{tpu_custom_call.1} parent=1 // loop_body
      %s25 = ssub.s32 %s20, 1
      %s26 = ssub.s32 %s20, 2
      %s33 = sadd.s32 1, %s28
      %p34 = scmp.ge.s32.totalorder %s33, 1
      %s35 = scalar_select %p34, 0, %s33
      %s36 = sadd.s32 1, %s27
      %s37 = scalar_select %p34, %s36, %s27
      %p38 = scmp.ge.s32.totalorder %s37, 2
      %s39 = scalar_select %p38, 0, %s37
      %s40 = ssub.s32 %s27, %s39
      %s41 = ssub.s32 %s28, %s35
      %s42 = sor.u32 %s40, %s41
      %p43 = scmp.eq.s32.totalorder %s42, 0
      %s45 = sadd.s32 %s44, 1
      %s46 = scalar_select %p43, %s44, %s45
      %p49 = pneg %p43
      %p50 = scmp.eq.s32.totalorder %s20, 1
      %p51 = por %p49, %p50
      %p52 = scmp.ne.s32.totalorder %s44, %s47
      %p53 = scmp.eq.s32.totalorder %s20, 0
      %p54 = por %p52, %p53
      %p55 = scmp.ne.s32.totalorder %s44, %s47
      %p56 = scmp.eq.s32.totalorder %s25, 1
      %p57 = por %p55, %p56
      %p58 = scmp.ne.s32.totalorder %s47, %s48
      %p59 = scmp.eq.s32.totalorder %s25, 0
      %p60 = por %p58, %p59
      %p61 = scmp.ne.s32.totalorder %s47, %s48
      %p62 = scmp.eq.s32.totalorder %s26, 1
      %p63 = por %p61, %p62
      %p65 = scmp.ne.s32.totalorder %s48, %s64
      %p66 = scmp.eq.s32.totalorder %s26, 0
      %p67 = por %p65, %p66
      %s68 = ssub.s32 %s27, %s39
      %p69 = scmp.eq.s32.totalorder %s68, 0
      %s71 = sadd.s32 %s70, 1
      %s72 = scalar_select %p69, %s70, %s71
      %p75 = pneg %p69
      %p76 = scmp.eq.s32.totalorder %s20, 1
      %p77 = por %p75, %p76
      %p78 = scmp.ne.s32.totalorder %s70, %s73
      %p79 = scmp.eq.s32.totalorder %s20, 0
      %p80 = por %p78, %p79
      %p81 = scmp.ne.s32.totalorder %s70, %s73
      %p82 = scmp.eq.s32.totalorder %s25, 1
      %p83 = por %p81, %p82
      %p84 = scmp.ne.s32.totalorder %s73, %s74
      %p85 = scmp.eq.s32.totalorder %s25, 0
      %p86 = por %p84, %p85
      %p87 = scmp.ne.s32.totalorder %s73, %s74
      %p88 = scmp.eq.s32.totalorder %s26, 1
      %p89 = por %p87, %p88
      %p91 = scmp.ne.s32.totalorder %s74, %s90
      %p92 = scmp.eq.s32.totalorder %s26, 0
      %p93 = por %p91, %p92
      %s95 = sadd.s32 %s94, 1
      %p98 = scmp.eq.s32.totalorder %s20, 1
      %p99 = scmp.ne.s32.totalorder %s94, %s96
      %p100 = scmp.eq.s32.totalorder %s20, 0
      %p101 = por %p99, %p100
      %p102 = scmp.ne.s32.totalorder %s94, %s96
      %p103 = scmp.eq.s32.totalorder %s25, 1
      %p104 = por %p102, %p103
      %p105 = scmp.ne.s32.totalorder %s96, %s97
      %p106 = scmp.eq.s32.totalorder %s25, 0
      %p107 = por %p105, %p106
      %p108 = scmp.ne.s32.totalorder %s96, %s97
      %p109 = scmp.eq.s32.totalorder %s26, 1
      %p110 = por %p108, %p109
      %p112 = scmp.ne.s32.totalorder %s97, %s111
      %p113 = scmp.eq.s32.totalorder %s26, 0
      %p114 = por %p112, %p113
      %s116 = sadd.s32 %s115, 1
      %p119 = scmp.eq.s32.totalorder %s20, 1
      %p120 = scmp.ne.s32.totalorder %s115, %s117
      %p121 = scmp.eq.s32.totalorder %s20, 0
      %p122 = por %p120, %p121
      %p123 = scmp.ne.s32.totalorder %s115, %s117
      %p124 = scmp.eq.s32.totalorder %s25, 1
      %p125 = por %p123, %p124
      %p126 = scmp.ne.s32.totalorder %s117, %s118
      %p127 = scmp.eq.s32.totalorder %s25, 0
      %p128 = por %p126, %p127
      %p129 = scmp.ne.s32.totalorder %s117, %s118
      %p130 = scmp.eq.s32.totalorder %s26, 1
      %p131 = por %p129, %p130
      %p133 = scmp.ne.s32.totalorder %s118, %s132
      %p134 = scmp.eq.s32.totalorder %s26, 0
      %p135 = por %p133, %p134
      %s136 = ssub.s32 %s27, %s39
      %p137 = scmp.eq.s32.totalorder %s136, 0
      %s139 = sadd.s32 %s138, 1
      %s140 = scalar_select %p137, %s138, %s139
      %p143 = pneg %p137
      %p144 = scmp.eq.s32.totalorder %s20, 1
      %p145 = por %p143, %p144
      %p146 = scmp.ne.s32.totalorder %s138, %s141
      %p147 = scmp.eq.s32.totalorder %s20, 0
      %p148 = por %p146, %p147
      %p149 = scmp.ne.s32.totalorder %s138, %s141
      %p150 = scmp.eq.s32.totalorder %s25, 1
      %p151 = por %p149, %p150
      %p152 = scmp.ne.s32.totalorder %s141, %s142
      %p153 = scmp.eq.s32.totalorder %s25, 0
      %p154 = por %p152, %p153
      %p155 = scmp.ne.s32.totalorder %s141, %s142
      %p156 = scmp.eq.s32.totalorder %s26, 1
      %p157 = por %p155, %p156
      %p159 = scmp.ne.s32.totalorder %s142, %s158
      %p160 = scmp.eq.s32.totalorder %s26, 0
      %p161 = por %p159, %p160
      %p162 = scmp.le.s32.totalorder 1, %s20
      %p163 = scmp.lt.s32.totalorder %s20, 3
      %p164 = pnand %p162, %p163
      %p165 = pneg %p164
      // Predicated region
      $region9: #{tpu_custom_call.1} parent=5 // pred_check
        _
      $region10: #{tpu_custom_call.1} parent=5 // pred_check_branch
        %167 = sbr.rel (%p164) target = $region12
      $region11: #{tpu_custom_call.1} parent=5 // pred_region
        %s168 = ssub.s32 %s20, 1
        // Predicated region
        $region13: #{tpu_custom_call.1} parent=11 // pred_check
          %p169 = pneg %p107
        $region14: #{tpu_custom_call.1} parent=11 // pred_check_branch
          %171 = sbr.rel (%p169) target = $region16
        $region15: #{tpu_custom_call.1} parent=11 // pred_region
          %s173 = ssub.s32 2048, 2048
          %174 = vsyncadd [#allocation7], %s173
          %s175 = sshll.u32 [#allocation8], 4
          %s176 = int_to_ptr.vmem [resolvable:$true] %s175
          %181 = dma.hbm_to_vmem [thread:$0]  %s2, 2048, %s176, [#allocation7], 128, 128, 8
        $region16: #{tpu_custom_call.1} parent=11 // pred_fallthru
          _
        // Predicated region
        $region17: #{tpu_custom_call.1} parent=11 // pred_check
          %p182 = pneg %p128
        $region18: #{tpu_custom_call.1} parent=11 // pred_check_branch
          %184 = sbr.rel (%p182) target = $region20
        $region19: #{tpu_custom_call.1} parent=11 // pred_region
          %s186 = ssub.s32 16, 16
          %187 = vsyncadd [#allocation10], %s186
          %s189 = sshll.u32 [#allocation9], 4
          %s190 = int_to_ptr.vmem [resolvable:$true] %s189
          %192 = dma.hbm_to_vmem [thread:$0]  %s3, 16, %s190, [#allocation10]
        $region20: #{tpu_custom_call.1} parent=11 // pred_fallthru
          _
      $region12: #{tpu_custom_call.1} parent=5 // pred_fallthru
        _
      %p193 = scmp.lt.s32.totalorder %s20, 2
      // Predicated region
      $region21: #{tpu_custom_call.1} parent=5 // pred_check
        %p194 = pneg %p193
      $region22: #{tpu_custom_call.1} parent=5 // pred_check_branch
        %196 = sbr.rel (%p194) target = $region24
      $region23: #{tpu_custom_call.1} parent=5 // pred_region
        // Predicated region
        $region25: #{tpu_custom_call.1} parent=23 // pred_check
          %p197 = pneg %p54
        $region26: #{tpu_custom_call.1} parent=23 // pred_check_branch
          %199 = sbr.rel (%p197) target = $region28
        $region27: #{tpu_custom_call.1} parent=23 // pred_region
          %s200 = sand.u32 %s44, 1
          %s201 = scalar_lea.sflag [#allocation4], %s200
          %s202 = sand.u32 %s44, 1
          %s203 = smul.addr %s202, 2048
          %s204 = scalar_lea.vmem [#allocation3], %s203
          %s205 = smul.u32 8, %s27
          %s206 = smul.u32 2, %s28
          %s208 = ssub.s32 32768, 32768
          %209 = vsyncadd %s201, %s208
          %s210 = smul.addr %s205, 32
          %s211 = sadd.s32 %s206, %s210
          %s212 = smul.addr %s211, 128
          %s213 = scalar_lea.hbm %s0, %s212
          %s214 = sshll.u32 %s204, 4
          %s215 = int_to_ptr.vmem [resolvable:$true] %s214
          %220 = dma.hbm_to_vmem [thread:$0]  %s213, 32768, %s215, %s201, 256, 256, 16
        $region28: #{tpu_custom_call.1} parent=23 // pred_fallthru
          _
        // Predicated region
        $region29: #{tpu_custom_call.1} parent=23 // pred_check
          %p221 = pneg %p80
        $region30: #{tpu_custom_call.1} parent=23 // pred_check_branch
          %223 = sbr.rel (%p221) target = $region32
        $region31: #{tpu_custom_call.1} parent=23 // pred_region
          %s224 = sand.u32 %s20, 1
          %s225 = scalar_lea.sflag [#allocation7], %s224
          %s226 = sand.u32 %s70, 1
          %s227 = smul.addr %s226, 8
          %s228 = scalar_lea.vmem [#allocation6], %s227
          %s230 = ssub.s32 128, 128
          %231 = vsyncadd %s225, %s230
          %s232 = smul.addr %s27, 128
          %s233 = scalar_lea.hbm %s1, %s232
          %s235 = sshll.u32 %s228, 4
          %s236 = int_to_ptr.vmem [resolvable:$true] %s235
          %238 = dma.hbm_to_vmem [thread:$0]  %s233, 128, %s236, %s225
        $region32: #{tpu_custom_call.1} parent=23 // pred_fallthru
          _
      $region24: #{tpu_custom_call.1} parent=5 // pred_fallthru
        _
      %p239 = scmp.le.s32.totalorder 1, %s20
      %p240 = scmp.lt.s32.totalorder %s20, 3
      %p241 = pnand %p239, %p240
      %p242 = pneg %p241
      // Predicated region
      $region33: #{tpu_custom_call.1} parent=5 // pred_check
        _
      $region34: #{tpu_custom_call.1} parent=5 // pred_check_branch
        %244 = sbr.rel (%p241) target = $region36
      $region35: #{tpu_custom_call.1} parent=5 // pred_region
        %s245 = ssub.s32 %s20, 1
        %s246 = sand.u32 %s47, 1
        %s247 = scalar_lea.sflag [#allocation4], %s246
        %s248 = sand.u32 %s47, 1
        %s249 = smul.addr %s248, 2048
        %s250 = scalar_lea.vmem [#allocation3], %s249
        // Predicated region
        $region37: #{tpu_custom_call.1} parent=35 // pred_check
          %p251 = pneg %p60
        $region38: #{tpu_custom_call.1} parent=35 // pred_check_branch
          %253 = sbr.rel (%p251) target = $region40
        $region39: #{tpu_custom_call.1} parent=35 // pred_region
          %254 = dma.done %s247, 32768
        $region40: #{tpu_custom_call.1} parent=35 // pred_fallthru
          _
        %s255 = sand.u32 %s25, 1
        %s256 = scalar_lea.sflag [#allocation7], %s255
        %s257 = sand.u32 %s73, 1
        %s258 = smul.addr %s257, 8
        %s259 = scalar_lea.vmem [#allocation6], %s258
        // Predicated region
        $region41: #{tpu_custom_call.1} parent=35 // pred_check
          %p260 = pneg %p86
        $region42: #{tpu_custom_call.1} parent=35 // pred_check_branch
          %262 = sbr.rel (%p260) target = $region44
        $region43: #{tpu_custom_call.1} parent=35 // pred_region
          %263 = dma.done %s256, 128
        $region44: #{tpu_custom_call.1} parent=35 // pred_fallthru
          _
        // Predicated region
        $region45: #{tpu_custom_call.1} parent=35 // pred_check
          %p264 = pneg %p107
        $region46: #{tpu_custom_call.1} parent=35 // pred_check_branch
          %266 = sbr.rel (%p264) target = $region48
        $region47: #{tpu_custom_call.1} parent=35 // pred_region
          %267 = dma.done [#allocation7], 2048
        $region48: #{tpu_custom_call.1} parent=35 // pred_fallthru
          _
        // Predicated region
        $region49: #{tpu_custom_call.1} parent=35 // pred_check
          %p268 = pneg %p128
        $region50: #{tpu_custom_call.1} parent=35 // pred_check_branch
          %270 = sbr.rel (%p268) target = $region52
        $region51: #{tpu_custom_call.1} parent=35 // pred_region
          %271 = dma.done [#allocation10], 16
        $region52: #{tpu_custom_call.1} parent=35 // pred_fallthru
          _
        %s272 = sand.u32 %s47, 1
        %s273 = scalar_lea.sflag [#allocation4], %s272
        %s274 = sand.u32 %s47, 1
        %s275 = smul.addr %s274, 2048
        %s276 = scalar_lea.vmem [#allocation3], %s275
        %p277 = pneg %p60
        %p278 = pneg %p57
        %s279 = sand.u32 %s25, 1
        %s280 = scalar_lea.sflag [#allocation7], %s279
        %s281 = sand.u32 %s73, 1
        %s282 = smul.addr %s281, 8
        %s283 = scalar_lea.vmem [#allocation6], %s282
        %p284 = pneg %p86
        %p285 = pneg %p83
        %p286 = pneg %p107
        %p287 = pneg %p104
        %p288 = pneg %p128
        %p289 = pneg %p125
        %p290 = pneg %p154
        %p291 = pneg %p151
        %s292 = sand.u32 %s141, 1
        %s293 = scalar_lea.sflag [#allocation5], %s292
        %s294 = sand.u32 %s141, 1
        %s295 = smul.addr %s294, 8
        %s296 = scalar_lea.vmem [#allocation11], %s295
        %s297 = smul.u32 8, %s29
        %s298 = smul.u32 2, %s30
        %p299 = scmp.eq.s32.totalorder %s30, 0
        // Predicated region
        $region53: #{tpu_custom_call.1} parent=35 // pred_check
          %p300 = pneg %p299
        $region54: #{tpu_custom_call.1} parent=35 // pred_check_branch
          %302 = sbr.rel (%p300) target = $region56
        $region55: #{tpu_custom_call.1} parent=35 // pred_region
          %303 = vst [vmem:[#allocation2] sm:$0xff] 0.0
        $region56: #{tpu_custom_call.1} parent=35 // pred_fallthru
          _
        %v304 = vld [vmem:[#allocation2] sm:$0xff]
        %v305 = vld [vmem:[%s250] sm:$0xff]
        %v306 = vld [vmem:[%s250 + $0x8] sm:$0xff]
        %v307 = vld [vmem:[%s250 + $0x10] sm:$0xff]
        %v308 = vld [vmem:[%s250 + $0x18] sm:$0xff]
        %v309 = vld [vmem:[%s250 + $0x20] sm:$0xff]
        %v310 = vld [vmem:[%s250 + $0x28] sm:$0xff]
        %v311 = vld [vmem:[%s250 + $0x30] sm:$0xff]
        %v312 = vld [vmem:[%s250 + $0x38] sm:$0xff]
        %v313 = vld [vmem:[%s250 + $0x40] sm:$0xff]
        %v314 = vld [vmem:[%s250 + $0x48] sm:$0xff]
        %v315 = vld [vmem:[%s250 + $0x50] sm:$0xff]
        %v316 = vld [vmem:[%s250 + $0x58] sm:$0xff]
        %v317 = vld [vmem:[%s250 + $0x60] sm:$0xff]
        %v318 = vld [vmem:[%s250 + $0x68] sm:$0xff]
        %v319 = vld [vmem:[%s250 + $0x70] sm:$0xff]
        %v320 = vld [vmem:[%s250 + $0x78] sm:$0xff]
        %v321 = vld [vmem:[%s250 + $0x80] sm:$0xff]
        %v322 = vld [vmem:[%s250 + $0x88] sm:$0xff]
        %v323 = vld [vmem:[%s250 + $0x90] sm:$0xff]
        %v324 = vld [vmem:[%s250 + $0x98] sm:$0xff]
        %v325 = vld [vmem:[%s250 + $0xa0] sm:$0xff]
        %v326 = vld [vmem:[%s250 + $0xa8] sm:$0xff]
        %v327 = vld [vmem:[%s250 + $0xb0] sm:$0xff]
        %v328 = vld [vmem:[%s250 + $0xb8] sm:$0xff]
        %v329 = vld [vmem:[%s250 + $0xc0] sm:$0xff]
        %v330 = vld [vmem:[%s250 + $0xc8] sm:$0xff]
        %v331 = vld [vmem:[%s250 + $0xd0] sm:$0xff]
        %v332 = vld [vmem:[%s250 + $0xd8] sm:$0xff]
        %v333 = vld [vmem:[%s250 + $0xe0] sm:$0xff]
        %v334 = vld [vmem:[%s250 + $0xe8] sm:$0xff]
        %v335 = vld [vmem:[%s250 + $0xf0] sm:$0xff]
        %v336 = vld [vmem:[%s250 + $0xf8] sm:$0xff]
        %v337 = vld [vmem:[%s250 + $0x100] sm:$0xff]
        %v338 = vld [vmem:[%s250 + $0x108] sm:$0xff]
        %v339 = vld [vmem:[%s250 + $0x110] sm:$0xff]
        %v340 = vld [vmem:[%s250 + $0x118] sm:$0xff]
        %v341 = vld [vmem:[%s250 + $0x120] sm:$0xff]
        %v342 = vld [vmem:[%s250 + $0x128] sm:$0xff]
        %v343 = vld [vmem:[%s250 + $0x130] sm:$0xff]
        %v344 = vld [vmem:[%s250 + $0x138] sm:$0xff]
        %v345 = vld [vmem:[%s250 + $0x140] sm:$0xff]
        %v346 = vld [vmem:[%s250 + $0x148] sm:$0xff]
        %v347 = vld [vmem:[%s250 + $0x150] sm:$0xff]
        %v348 = vld [vmem:[%s250 + $0x158] sm:$0xff]
        %v349 = vld [vmem:[%s250 + $0x160] sm:$0xff]
        %v350 = vld [vmem:[%s250 + $0x168] sm:$0xff]
        %v351 = vld [vmem:[%s250 + $0x170] sm:$0xff]
        %v352 = vld [vmem:[%s250 + $0x178] sm:$0xff]
        %v353 = vld [vmem:[%s250 + $0x180] sm:$0xff]
        %v354 = vld [vmem:[%s250 + $0x188] sm:$0xff]
        %v355 = vld [vmem:[%s250 + $0x190] sm:$0xff]
        %v356 = vld [vmem:[%s250 + $0x198] sm:$0xff]
        %v357 = vld [vmem:[%s250 + $0x1a0] sm:$0xff]
        %v358 = vld [vmem:[%s250 + $0x1a8] sm:$0xff]
        %v359 = vld [vmem:[%s250 + $0x1b0] sm:$0xff]
        %v360 = vld [vmem:[%s250 + $0x1b8] sm:$0xff]
        %v361 = vld [vmem:[%s250 + $0x1c0] sm:$0xff]
        %v362 = vld [vmem:[%s250 + $0x1c8] sm:$0xff]
        %v363 = vld [vmem:[%s250 + $0x1d0] sm:$0xff]
        %v364 = vld [vmem:[%s250 + $0x1d8] sm:$0xff]
        %v365 = vld [vmem:[%s250 + $0x1e0] sm:$0xff]
        %v366 = vld [vmem:[%s250 + $0x1e8] sm:$0xff]
        %v367 = vld [vmem:[%s250 + $0x1f0] sm:$0xff]
        %v368 = vld [vmem:[%s250 + $0x1f8] sm:$0xff]
        %v369 = vld [vmem:[%s250 + $0x200] sm:$0xff]
        %v370 = vld [vmem:[%s250 + $0x208] sm:$0xff]
        %v371 = vld [vmem:[%s250 + $0x210] sm:$0xff]
        %v372 = vld [vmem:[%s250 + $0x218] sm:$0xff]
        %v373 = vld [vmem:[%s250 + $0x220] sm:$0xff]
        %v374 = vld [vmem:[%s250 + $0x228] sm:$0xff]
        %v375 = vld [vmem:[%s250 + $0x230] sm:$0xff]
        %v376 = vld [vmem:[%s250 + $0x238] sm:$0xff]
        %v377 = vld [vmem:[%s250 + $0x240] sm:$0xff]
        %v378 = vld [vmem:[%s250 + $0x248] sm:$0xff]
        %v379 = vld [vmem:[%s250 + $0x250] sm:$0xff]
        %v380 = vld [vmem:[%s250 + $0x258] sm:$0xff]
        %v381 = vld [vmem:[%s250 + $0x260] sm:$0xff]
        %v382 = vld [vmem:[%s250 + $0x268] sm:$0xff]
        %v383 = vld [vmem:[%s250 + $0x270] sm:$0xff]
        %v384 = vld [vmem:[%s250 + $0x278] sm:$0xff]
        %v385 = vld [vmem:[%s250 + $0x280] sm:$0xff]
        %v386 = vld [vmem:[%s250 + $0x288] sm:$0xff]
        %v387 = vld [vmem:[%s250 + $0x290] sm:$0xff]
        %v388 = vld [vmem:[%s250 + $0x298] sm:$0xff]
        %v389 = vld [vmem:[%s250 + $0x2a0] sm:$0xff]
        %v390 = vld [vmem:[%s250 + $0x2a8] sm:$0xff]
        %v391 = vld [vmem:[%s250 + $0x2b0] sm:$0xff]
        %v392 = vld [vmem:[%s250 + $0x2b8] sm:$0xff]
        %v393 = vld [vmem:[%s250 + $0x2c0] sm:$0xff]
        %v394 = vld [vmem:[%s250 + $0x2c8] sm:$0xff]
        %v395 = vld [vmem:[%s250 + $0x2d0] sm:$0xff]
        %v396 = vld [vmem:[%s250 + $0x2d8] sm:$0xff]
        %v397 = vld [vmem:[%s250 + $0x2e0] sm:$0xff]
        %v398 = vld [vmem:[%s250 + $0x2e8] sm:$0xff]
        %v399 = vld [vmem:[%s250 + $0x2f0] sm:$0xff]
        %v400 = vld [vmem:[%s250 + $0x2f8] sm:$0xff]
        %v401 = vld [vmem:[%s250 + $0x300] sm:$0xff]
        %v402 = vld [vmem:[%s250 + $0x308] sm:$0xff]
        %v403 = vld [vmem:[%s250 + $0x310] sm:$0xff]
        %v404 = vld [vmem:[%s250 + $0x318] sm:$0xff]
        %v405 = vld [vmem:[%s250 + $0x320] sm:$0xff]
        %v406 = vld [vmem:[%s250 + $0x328] sm:$0xff]
        %v407 = vld [vmem:[%s250 + $0x330] sm:$0xff]
        %v408 = vld [vmem:[%s250 + $0x338] sm:$0xff]
        %v409 = vld [vmem:[%s250 + $0x340] sm:$0xff]
        %v410 = vld [vmem:[%s250 + $0x348] sm:$0xff]
        %v411 = vld [vmem:[%s250 + $0x350] sm:$0xff]
        %v412 = vld [vmem:[%s250 + $0x358] sm:$0xff]
        %v413 = vld [vmem:[%s250 + $0x360] sm:$0xff]
        %v414 = vld [vmem:[%s250 + $0x368] sm:$0xff]
        %v415 = vld [vmem:[%s250 + $0x370] sm:$0xff]
        %v416 = vld [vmem:[%s250 + $0x378] sm:$0xff]
        %v417 = vld [vmem:[%s250 + $0x380] sm:$0xff]
        %v418 = vld [vmem:[%s250 + $0x388] sm:$0xff]
        %v419 = vld [vmem:[%s250 + $0x390] sm:$0xff]
        %v420 = vld [vmem:[%s250 + $0x398] sm:$0xff]
        %v421 = vld [vmem:[%s250 + $0x3a0] sm:$0xff]
        %v422 = vld [vmem:[%s250 + $0x3a8] sm:$0xff]
        %v423 = vld [vmem:[%s250 + $0x3b0] sm:$0xff]
        %v424 = vld [vmem:[%s250 + $0x3b8] sm:$0xff]
        %v425 = vld [vmem:[%s250 + $0x3c0] sm:$0xff]
        %v426 = vld [vmem:[%s250 + $0x3c8] sm:$0xff]
        %v427 = vld [vmem:[%s250 + $0x3d0] sm:$0xff]
        %v428 = vld [vmem:[%s250 + $0x3d8] sm:$0xff]
        %v429 = vld [vmem:[%s250 + $0x3e0] sm:$0xff]
        %v430 = vld [vmem:[%s250 + $0x3e8] sm:$0xff]
        %v431 = vld [vmem:[%s250 + $0x3f0] sm:$0xff]
        %v432 = vld [vmem:[%s250 + $0x3f8] sm:$0xff]
        %v433 = vld [vmem:[%s250 + $0x400] sm:$0xff]
        %v434 = vld [vmem:[%s250 + $0x408] sm:$0xff]
        %v435 = vld [vmem:[%s250 + $0x410] sm:$0xff]
        %v436 = vld [vmem:[%s250 + $0x418] sm:$0xff]
        %v437 = vld [vmem:[%s250 + $0x420] sm:$0xff]
        %v438 = vld [vmem:[%s250 + $0x428] sm:$0xff]
        %v439 = vld [vmem:[%s250 + $0x430] sm:$0xff]
        %v440 = vld [vmem:[%s250 + $0x438] sm:$0xff]
        %v441 = vld [vmem:[%s250 + $0x440] sm:$0xff]
        %v442 = vld [vmem:[%s250 + $0x448] sm:$0xff]
        %v443 = vld [vmem:[%s250 + $0x450] sm:$0xff]
        %v444 = vld [vmem:[%s250 + $0x458] sm:$0xff]
        %v445 = vld [vmem:[%s250 + $0x460] sm:$0xff]
        %v446 = vld [vmem:[%s250 + $0x468] sm:$0xff]
        %v447 = vld [vmem:[%s250 + $0x470] sm:$0xff]
        %v448 = vld [vmem:[%s250 + $0x478] sm:$0xff]
        %v449 = vld [vmem:[%s250 + $0x480] sm:$0xff]
        %v450 = vld [vmem:[%s250 + $0x488] sm:$0xff]
        %v451 = vld [vmem:[%s250 + $0x490] sm:$0xff]
        %v452 = vld [vmem:[%s250 + $0x498] sm:$0xff]
        %v453 = vld [vmem:[%s250 + $0x4a0] sm:$0xff]
        %v454 = vld [vmem:[%s250 + $0x4a8] sm:$0xff]
        %v455 = vld [vmem:[%s250 + $0x4b0] sm:$0xff]
        %v456 = vld [vmem:[%s250 + $0x4b8] sm:$0xff]
        %v457 = vld [vmem:[%s250 + $0x4c0] sm:$0xff]
        %v458 = vld [vmem:[%s250 + $0x4c8] sm:$0xff]
        %v459 = vld [vmem:[%s250 + $0x4d0] sm:$0xff]
        %v460 = vld [vmem:[%s250 + $0x4d8] sm:$0xff]
        %v461 = vld [vmem:[%s250 + $0x4e0] sm:$0xff]
        %v462 = vld [vmem:[%s250 + $0x4e8] sm:$0xff]
        %v463 = vld [vmem:[%s250 + $0x4f0] sm:$0xff]
        %v464 = vld [vmem:[%s250 + $0x4f8] sm:$0xff]
        %v465 = vld [vmem:[%s250 + $0x500] sm:$0xff]
        %v466 = vld [vmem:[%s250 + $0x508] sm:$0xff]
        %v467 = vld [vmem:[%s250 + $0x510] sm:$0xff]
        %v468 = vld [vmem:[%s250 + $0x518] sm:$0xff]
        %v469 = vld [vmem:[%s250 + $0x520] sm:$0xff]
        %v470 = vld [vmem:[%s250 + $0x528] sm:$0xff]
        %v471 = vld [vmem:[%s250 + $0x530] sm:$0xff]
        %v472 = vld [vmem:[%s250 + $0x538] sm:$0xff]
        %v473 = vld [vmem:[%s250 + $0x540] sm:$0xff]
        %v474 = vld [vmem:[%s250 + $0x548] sm:$0xff]
        %v475 = vld [vmem:[%s250 + $0x550] sm:$0xff]
        %v476 = vld [vmem:[%s250 + $0x558] sm:$0xff]
        %v477 = vld [vmem:[%s250 + $0x560] sm:$0xff]
        %v478 = vld [vmem:[%s250 + $0x568] sm:$0xff]
        %v479 = vld [vmem:[%s250 + $0x570] sm:$0xff]
        %v480 = vld [vmem:[%s250 + $0x578] sm:$0xff]
        %v481 = vld [vmem:[%s250 + $0x580] sm:$0xff]
        %v482 = vld [vmem:[%s250 + $0x588] sm:$0xff]
        %v483 = vld [vmem:[%s250 + $0x590] sm:$0xff]
        %v484 = vld [vmem:[%s250 + $0x598] sm:$0xff]
        %v485 = vld [vmem:[%s250 + $0x5a0] sm:$0xff]
        %v486 = vld [vmem:[%s250 + $0x5a8] sm:$0xff]
        %v487 = vld [vmem:[%s250 + $0x5b0] sm:$0xff]
        %v488 = vld [vmem:[%s250 + $0x5b8] sm:$0xff]
        %v489 = vld [vmem:[%s250 + $0x5c0] sm:$0xff]
        %v490 = vld [vmem:[%s250 + $0x5c8] sm:$0xff]
        %v491 = vld [vmem:[%s250 + $0x5d0] sm:$0xff]
        %v492 = vld [vmem:[%s250 + $0x5d8] sm:$0xff]
        %v493 = vld [vmem:[%s250 + $0x5e0] sm:$0xff]
        %v494 = vld [vmem:[%s250 + $0x5e8] sm:$0xff]
        %v495 = vld [vmem:[%s250 + $0x5f0] sm:$0xff]
        %v496 = vld [vmem:[%s250 + $0x5f8] sm:$0xff]
        %v497 = vld [vmem:[%s250 + $0x600] sm:$0xff]
        %v498 = vld [vmem:[%s250 + $0x608] sm:$0xff]
        %v499 = vld [vmem:[%s250 + $0x610] sm:$0xff]
        %v500 = vld [vmem:[%s250 + $0x618] sm:$0xff]
        %v501 = vld [vmem:[%s250 + $0x620] sm:$0xff]
        %v502 = vld [vmem:[%s250 + $0x628] sm:$0xff]
        %v503 = vld [vmem:[%s250 + $0x630] sm:$0xff]
        %v504 = vld [vmem:[%s250 + $0x638] sm:$0xff]
        %v505 = vld [vmem:[%s250 + $0x640] sm:$0xff]
        %v506 = vld [vmem:[%s250 + $0x648] sm:$0xff]
        %v507 = vld [vmem:[%s250 + $0x650] sm:$0xff]
        %v508 = vld [vmem:[%s250 + $0x658] sm:$0xff]
        %v509 = vld [vmem:[%s250 + $0x660] sm:$0xff]
        %v510 = vld [vmem:[%s250 + $0x668] sm:$0xff]
        %v511 = vld [vmem:[%s250 + $0x670] sm:$0xff]
        %v512 = vld [vmem:[%s250 + $0x678] sm:$0xff]
        %v513 = vld [vmem:[%s250 + $0x680] sm:$0xff]
        %v514 = vld [vmem:[%s250 + $0x688] sm:$0xff]
        %v515 = vld [vmem:[%s250 + $0x690] sm:$0xff]
        %v516 = vld [vmem:[%s250 + $0x698] sm:$0xff]
        %v517 = vld [vmem:[%s250 + $0x6a0] sm:$0xff]
        %v518 = vld [vmem:[%s250 + $0x6a8] sm:$0xff]
        %v519 = vld [vmem:[%s250 + $0x6b0] sm:$0xff]
        %v520 = vld [vmem:[%s250 + $0x6b8] sm:$0xff]
        %v521 = vld [vmem:[%s250 + $0x6c0] sm:$0xff]
        %v522 = vld [vmem:[%s250 + $0x6c8] sm:$0xff]
        %v523 = vld [vmem:[%s250 + $0x6d0] sm:$0xff]
        %v524 = vld [vmem:[%s250 + $0x6d8] sm:$0xff]
        %v525 = vld [vmem:[%s250 + $0x6e0] sm:$0xff]
        %v526 = vld [vmem:[%s250 + $0x6e8] sm:$0xff]
        %v527 = vld [vmem:[%s250 + $0x6f0] sm:$0xff]
        %v528 = vld [vmem:[%s250 + $0x6f8] sm:$0xff]
        %v529 = vld [vmem:[%s250 + $0x700] sm:$0xff]
        %v530 = vld [vmem:[%s250 + $0x708] sm:$0xff]
        %v531 = vld [vmem:[%s250 + $0x710] sm:$0xff]
        %v532 = vld [vmem:[%s250 + $0x718] sm:$0xff]
        %v533 = vld [vmem:[%s250 + $0x720] sm:$0xff]
        %v534 = vld [vmem:[%s250 + $0x728] sm:$0xff]
        %v535 = vld [vmem:[%s250 + $0x730] sm:$0xff]
        %v536 = vld [vmem:[%s250 + $0x738] sm:$0xff]
        %v537 = vld [vmem:[%s250 + $0x740] sm:$0xff]
        %v538 = vld [vmem:[%s250 + $0x748] sm:$0xff]
        %v539 = vld [vmem:[%s250 + $0x750] sm:$0xff]
        %v540 = vld [vmem:[%s250 + $0x758] sm:$0xff]
        %v541 = vld [vmem:[%s250 + $0x760] sm:$0xff]
        %v542 = vld [vmem:[%s250 + $0x768] sm:$0xff]
        %v543 = vld [vmem:[%s250 + $0x770] sm:$0xff]
        %v544 = vld [vmem:[%s250 + $0x778] sm:$0xff]
        %v545 = vld [vmem:[%s250 + $0x780] sm:$0xff]
        %v546 = vld [vmem:[%s250 + $0x788] sm:$0xff]
        %v547 = vld [vmem:[%s250 + $0x790] sm:$0xff]
        %v548 = vld [vmem:[%s250 + $0x798] sm:$0xff]
        %v549 = vld [vmem:[%s250 + $0x7a0] sm:$0xff]
        %v550 = vld [vmem:[%s250 + $0x7a8] sm:$0xff]
        %v551 = vld [vmem:[%s250 + $0x7b0] sm:$0xff]
        %v552 = vld [vmem:[%s250 + $0x7b8] sm:$0xff]
        %v553 = vld [vmem:[%s250 + $0x7c0] sm:$0xff]
        %v554 = vld [vmem:[%s250 + $0x7c8] sm:$0xff]
        %v555 = vld [vmem:[%s250 + $0x7d0] sm:$0xff]
        %v556 = vld [vmem:[%s250 + $0x7d8] sm:$0xff]
        %v557 = vld [vmem:[%s250 + $0x7e0] sm:$0xff]
        %v558 = vld [vmem:[%s250 + $0x7e8] sm:$0xff]
        %v559 = vld [vmem:[%s250 + $0x7f0] sm:$0xff]
        %v560 = vld [vmem:[%s250 + $0x7f8] sm:$0xff]
        %v561 = vadd.f32 %v305, %v306
        %562 = vadd.xlane.f32.xlu0 %v561
        %v563 = vpop.xlane.xlu0 %562
        %v564 = vadd.f32 %v307, %v308
        %565 = vadd.xlane.f32.xlu0 %v564
        %v566 = vpop.xlane.xlu0 %565
        %v567 = vadd.f32 %v309, %v310
        %568 = vadd.xlane.f32.xlu0 %v567
        %v569 = vpop.xlane.xlu0 %568
        %v570 = vadd.f32 %v311, %v312
        %571 = vadd.xlane.f32.xlu0 %v570
        %v572 = vpop.xlane.xlu0 %571
        %v573 = vadd.f32 %v313, %v314
        %574 = vadd.xlane.f32.xlu0 %v573
        %v575 = vpop.xlane.xlu0 %574
        %v576 = vadd.f32 %v315, %v316
        %577 = vadd.xlane.f32.xlu0 %v576
        %v578 = vpop.xlane.xlu0 %577
        %v579 = vadd.f32 %v317, %v318
        %580 = vadd.xlane.f32.xlu0 %v579
        %v581 = vpop.xlane.xlu0 %580
        %v582 = vadd.f32 %v319, %v320
        %583 = vadd.xlane.f32.xlu0 %v582
        %v584 = vpop.xlane.xlu0 %583
        %v585 = vadd.f32 %v321, %v322
        %586 = vadd.xlane.f32.xlu0 %v585
        %v587 = vpop.xlane.xlu0 %586
        %v588 = vadd.f32 %v323, %v324
        %589 = vadd.xlane.f32.xlu0 %v588
        %v590 = vpop.xlane.xlu0 %589
        %v591 = vadd.f32 %v325, %v326
        %592 = vadd.xlane.f32.xlu0 %v591
        %v593 = vpop.xlane.xlu0 %592
        %v594 = vadd.f32 %v327, %v328
        %595 = vadd.xlane.f32.xlu0 %v594
        %v596 = vpop.xlane.xlu0 %595
        %v597 = vadd.f32 %v329, %v330
        %598 = vadd.xlane.f32.xlu0 %v597
        %v599 = vpop.xlane.xlu0 %598
        %v600 = vadd.f32 %v331, %v332
        %601 = vadd.xlane.f32.xlu0 %v600
        %v602 = vpop.xlane.xlu0 %601
        %v603 = vadd.f32 %v333, %v334
        %604 = vadd.xlane.f32.xlu0 %v603
        %v605 = vpop.xlane.xlu0 %604
        %v606 = vadd.f32 %v335, %v336
        %607 = vadd.xlane.f32.xlu0 %v606
        %v608 = vpop.xlane.xlu0 %607
        %v609 = vadd.f32 %v337, %v338
        %610 = vadd.xlane.f32.xlu0 %v609
        %v611 = vpop.xlane.xlu0 %610
        %v612 = vadd.f32 %v339, %v340
        %613 = vadd.xlane.f32.xlu0 %v612
        %v614 = vpop.xlane.xlu0 %613
        %v615 = vadd.f32 %v341, %v342
        %616 = vadd.xlane.f32.xlu0 %v615
        %v617 = vpop.xlane.xlu0 %616
        %v618 = vadd.f32 %v343, %v344
        %619 = vadd.xlane.f32.xlu0 %v618
        %v620 = vpop.xlane.xlu0 %619
        %v621 = vadd.f32 %v345, %v346
        %622 = vadd.xlane.f32.xlu0 %v621
        %v623 = vpop.xlane.xlu0 %622
        %v624 = vadd.f32 %v347, %v348
        %625 = vadd.xlane.f32.xlu0 %v624
        %v626 = vpop.xlane.xlu0 %625
        %v627 = vadd.f32 %v349, %v350
        %628 = vadd.xlane.f32.xlu0 %v627
        %v629 = vpop.xlane.xlu0 %628
        %v630 = vadd.f32 %v351, %v352
        %631 = vadd.xlane.f32.xlu0 %v630
        %v632 = vpop.xlane.xlu0 %631
        %v633 = vadd.f32 %v353, %v354
        %634 = vadd.xlane.f32.xlu0 %v633
        %v635 = vpop.xlane.xlu0 %634
        %v636 = vadd.f32 %v355, %v356
        %637 = vadd.xlane.f32.xlu0 %v636
        %v638 = vpop.xlane.xlu0 %637
        %v639 = vadd.f32 %v357, %v358
        %640 = vadd.xlane.f32.xlu0 %v639
        %v641 = vpop.xlane.xlu0 %640
        %v642 = vadd.f32 %v359, %v360
        %643 = vadd.xlane.f32.xlu0 %v642
        %v644 = vpop.xlane.xlu0 %643
        %v645 = vadd.f32 %v361, %v362
        %646 = vadd.xlane.f32.xlu0 %v645
        %v647 = vpop.xlane.xlu0 %646
        %v648 = vadd.f32 %v363, %v364
        %649 = vadd.xlane.f32.xlu0 %v648
        %v650 = vpop.xlane.xlu0 %649
        %v651 = vadd.f32 %v365, %v366
        %652 = vadd.xlane.f32.xlu0 %v651
        %v653 = vpop.xlane.xlu0 %652
        %v654 = vadd.f32 %v367, %v368
        %655 = vadd.xlane.f32.xlu0 %v654
        %v656 = vpop.xlane.xlu0 %655
        %v657 = vadd.f32 %v369, %v370
        %658 = vadd.xlane.f32.xlu0 %v657
        %v659 = vpop.xlane.xlu0 %658
        %v660 = vadd.f32 %v371, %v372
        %661 = vadd.xlane.f32.xlu0 %v660
        %v662 = vpop.xlane.xlu0 %661
        %v663 = vadd.f32 %v373, %v374
        %664 = vadd.xlane.f32.xlu0 %v663
        %v665 = vpop.xlane.xlu0 %664
        %v666 = vadd.f32 %v375, %v376
        %667 = vadd.xlane.f32.xlu0 %v666
        %v668 = vpop.xlane.xlu0 %667
        %v669 = vadd.f32 %v377, %v378
        %670 = vadd.xlane.f32.xlu0 %v669
        %v671 = vpop.xlane.xlu0 %670
        %v672 = vadd.f32 %v379, %v380
        %673 = vadd.xlane.f32.xlu0 %v672
        %v674 = vpop.xlane.xlu0 %673
        %v675 = vadd.f32 %v381, %v382
        %676 = vadd.xlane.f32.xlu0 %v675
        %v677 = vpop.xlane.xlu0 %676
        %v678 = vadd.f32 %v383, %v384
        %679 = vadd.xlane.f32.xlu0 %v678
        %v680 = vpop.xlane.xlu0 %679
        %v681 = vadd.f32 %v385, %v386
        %682 = vadd.xlane.f32.xlu0 %v681
        %v683 = vpop.xlane.xlu0 %682
        %v684 = vadd.f32 %v387, %v388
        %685 = vadd.xlane.f32.xlu0 %v684
        %v686 = vpop.xlane.xlu0 %685
        %v687 = vadd.f32 %v389, %v390
        %688 = vadd.xlane.f32.xlu0 %v687
        %v689 = vpop.xlane.xlu0 %688
        %v690 = vadd.f32 %v391, %v392
        %691 = vadd.xlane.f32.xlu0 %v690
        %v692 = vpop.xlane.xlu0 %691
        %v693 = vadd.f32 %v393, %v394
        %694 = vadd.xlane.f32.xlu0 %v693
        %v695 = vpop.xlane.xlu0 %694
        %v696 = vadd.f32 %v395, %v396
        %697 = vadd.xlane.f32.xlu0 %v696
        %v698 = vpop.xlane.xlu0 %697
        %v699 = vadd.f32 %v397, %v398
        %700 = vadd.xlane.f32.xlu0 %v699
        %v701 = vpop.xlane.xlu0 %700
        %v702 = vadd.f32 %v399, %v400
        %703 = vadd.xlane.f32.xlu0 %v702
        %v704 = vpop.xlane.xlu0 %703
        %v705 = vadd.f32 %v401, %v402
        %706 = vadd.xlane.f32.xlu0 %v705
        %v707 = vpop.xlane.xlu0 %706
        %v708 = vadd.f32 %v403, %v404
        %709 = vadd.xlane.f32.xlu0 %v708
        %v710 = vpop.xlane.xlu0 %709
        %v711 = vadd.f32 %v405, %v406
        %712 = vadd.xlane.f32.xlu0 %v711
        %v713 = vpop.xlane.xlu0 %712
        %v714 = vadd.f32 %v407, %v408
        %715 = vadd.xlane.f32.xlu0 %v714
        %v716 = vpop.xlane.xlu0 %715
        %v717 = vadd.f32 %v409, %v410
        %718 = vadd.xlane.f32.xlu0 %v717
        %v719 = vpop.xlane.xlu0 %718
        %v720 = vadd.f32 %v411, %v412
        %721 = vadd.xlane.f32.xlu0 %v720
        %v722 = vpop.xlane.xlu0 %721
        %v723 = vadd.f32 %v413, %v414
        %724 = vadd.xlane.f32.xlu0 %v723
        %v725 = vpop.xlane.xlu0 %724
        %v726 = vadd.f32 %v415, %v416
        %727 = vadd.xlane.f32.xlu0 %v726
        %v728 = vpop.xlane.xlu0 %727
        %v729 = vadd.f32 %v417, %v418
        %730 = vadd.xlane.f32.xlu0 %v729
        %v731 = vpop.xlane.xlu0 %730
        %v732 = vadd.f32 %v419, %v420
        %733 = vadd.xlane.f32.xlu0 %v732
        %v734 = vpop.xlane.xlu0 %733
        %v735 = vadd.f32 %v421, %v422
        %736 = vadd.xlane.f32.xlu0 %v735
        %v737 = vpop.xlane.xlu0 %736
        %v738 = vadd.f32 %v423, %v424
        %739 = vadd.xlane.f32.xlu0 %v738
        %v740 = vpop.xlane.xlu0 %739
        %v741 = vadd.f32 %v425, %v426
        %742 = vadd.xlane.f32.xlu0 %v741
        %v743 = vpop.xlane.xlu0 %742
        %v744 = vadd.f32 %v427, %v428
        %745 = vadd.xlane.f32.xlu0 %v744
        %v746 = vpop.xlane.xlu0 %745
        %v747 = vadd.f32 %v429, %v430
        %748 = vadd.xlane.f32.xlu0 %v747
        %v749 = vpop.xlane.xlu0 %748
        %v750 = vadd.f32 %v431, %v432
        %751 = vadd.xlane.f32.xlu0 %v750
        %v752 = vpop.xlane.xlu0 %751
        %v753 = vadd.f32 %v433, %v434
        %754 = vadd.xlane.f32.xlu0 %v753
        %v755 = vpop.xlane.xlu0 %754
        %v756 = vadd.f32 %v435, %v436
        %757 = vadd.xlane.f32.xlu0 %v756
        %v758 = vpop.xlane.xlu0 %757
        %v759 = vadd.f32 %v437, %v438
        %760 = vadd.xlane.f32.xlu0 %v759
        %v761 = vpop.xlane.xlu0 %760
        %v762 = vadd.f32 %v439, %v440
        %763 = vadd.xlane.f32.xlu0 %v762
        %v764 = vpop.xlane.xlu0 %763
        %v765 = vadd.f32 %v441, %v442
        %766 = vadd.xlane.f32.xlu0 %v765
        %v767 = vpop.xlane.xlu0 %766
        %v768 = vadd.f32 %v443, %v444
        %769 = vadd.xlane.f32.xlu0 %v768
        %v770 = vpop.xlane.xlu0 %769
        %v771 = vadd.f32 %v445, %v446
        %772 = vadd.xlane.f32.xlu0 %v771
        %v773 = vpop.xlane.xlu0 %772
        %v774 = vadd.f32 %v447, %v448
        %775 = vadd.xlane.f32.xlu0 %v774
        %v776 = vpop.xlane.xlu0 %775
        %v777 = vadd.f32 %v449, %v450
        %778 = vadd.xlane.f32.xlu0 %v777
        %v779 = vpop.xlane.xlu0 %778
        %v780 = vadd.f32 %v451, %v452
        %781 = vadd.xlane.f32.xlu0 %v780
        %v782 = vpop.xlane.xlu0 %781
        %v783 = vadd.f32 %v453, %v454
        %784 = vadd.xlane.f32.xlu0 %v783
        %v785 = vpop.xlane.xlu0 %784
        %v786 = vadd.f32 %v455, %v456
        %787 = vadd.xlane.f32.xlu0 %v786
        %v788 = vpop.xlane.xlu0 %787
        %v789 = vadd.f32 %v457, %v458
        %790 = vadd.xlane.f32.xlu0 %v789
        %v791 = vpop.xlane.xlu0 %790
        %v792 = vadd.f32 %v459, %v460
        %793 = vadd.xlane.f32.xlu0 %v792
        %v794 = vpop.xlane.xlu0 %793
        %v795 = vadd.f32 %v461, %v462
        %796 = vadd.xlane.f32.xlu0 %v795
        %v797 = vpop.xlane.xlu0 %796
        %v798 = vadd.f32 %v463, %v464
        %799 = vadd.xlane.f32.xlu0 %v798
        %v800 = vpop.xlane.xlu0 %799
        %v801 = vadd.f32 %v465, %v466
        %802 = vadd.xlane.f32.xlu0 %v801
        %v803 = vpop.xlane.xlu0 %802
        %v804 = vadd.f32 %v467, %v468
        %805 = vadd.xlane.f32.xlu0 %v804
        %v806 = vpop.xlane.xlu0 %805
        %v807 = vadd.f32 %v469, %v470
        %808 = vadd.xlane.f32.xlu0 %v807
        %v809 = vpop.xlane.xlu0 %808
        %v810 = vadd.f32 %v471, %v472
        %811 = vadd.xlane.f32.xlu0 %v810
        %v812 = vpop.xlane.xlu0 %811
        %v813 = vadd.f32 %v473, %v474
        %814 = vadd.xlane.f32.xlu0 %v813
        %v815 = vpop.xlane.xlu0 %814
        %v816 = vadd.f32 %v475, %v476
        %817 = vadd.xlane.f32.xlu0 %v816
        %v818 = vpop.xlane.xlu0 %817
        %v819 = vadd.f32 %v477, %v478
        %820 = vadd.xlane.f32.xlu0 %v819
        %v821 = vpop.xlane.xlu0 %820
        %v822 = vadd.f32 %v479, %v480
        %823 = vadd.xlane.f32.xlu0 %v822
        %v824 = vpop.xlane.xlu0 %823
        %v825 = vadd.f32 %v481, %v482
        %826 = vadd.xlane.f32.xlu0 %v825
        %v827 = vpop.xlane.xlu0 %826
        %v828 = vadd.f32 %v483, %v484
        %829 = vadd.xlane.f32.xlu0 %v828
        %v830 = vpop.xlane.xlu0 %829
        %v831 = vadd.f32 %v485, %v486
        %832 = vadd.xlane.f32.xlu0 %v831
        %v833 = vpop.xlane.xlu0 %832
        %v834 = vadd.f32 %v487, %v488
        %835 = vadd.xlane.f32.xlu0 %v834
        %v836 = vpop.xlane.xlu0 %835
        %v837 = vadd.f32 %v489, %v490
        %838 = vadd.xlane.f32.xlu0 %v837
        %v839 = vpop.xlane.xlu0 %838
        %v840 = vadd.f32 %v491, %v492
        %841 = vadd.xlane.f32.xlu0 %v840
        %v842 = vpop.xlane.xlu0 %841
        %v843 = vadd.f32 %v493, %v494
        %844 = vadd.xlane.f32.xlu0 %v843
        %v845 = vpop.xlane.xlu0 %844
        %v846 = vadd.f32 %v495, %v496
        %847 = vadd.xlane.f32.xlu0 %v846
        %v848 = vpop.xlane.xlu0 %847
        %v849 = vadd.f32 %v497, %v498
        %850 = vadd.xlane.f32.xlu0 %v849
        %v851 = vpop.xlane.xlu0 %850
        %v852 = vadd.f32 %v499, %v500
        %853 = vadd.xlane.f32.xlu0 %v852
        %v854 = vpop.xlane.xlu0 %853
        %v855 = vadd.f32 %v501, %v502
        %856 = vadd.xlane.f32.xlu0 %v855
        %v857 = vpop.xlane.xlu0 %856
        %v858 = vadd.f32 %v503, %v504
        %859 = vadd.xlane.f32.xlu0 %v858
        %v860 = vpop.xlane.xlu0 %859
        %v861 = vadd.f32 %v505, %v506
        %862 = vadd.xlane.f32.xlu0 %v861
        %v863 = vpop.xlane.xlu0 %862
        %v864 = vadd.f32 %v507, %v508
        %865 = vadd.xlane.f32.xlu0 %v864
        %v866 = vpop.xlane.xlu0 %865
        %v867 = vadd.f32 %v509, %v510
        %868 = vadd.xlane.f32.xlu0 %v867
        %v869 = vpop.xlane.xlu0 %868
        %v870 = vadd.f32 %v511, %v512
        %871 = vadd.xlane.f32.xlu0 %v870
        %v872 = vpop.xlane.xlu0 %871
        %v873 = vadd.f32 %v513, %v514
        %874 = vadd.xlane.f32.xlu0 %v873
        %v875 = vpop.xlane.xlu0 %874
        %v876 = vadd.f32 %v515, %v516
        %877 = vadd.xlane.f32.xlu0 %v876
        %v878 = vpop.xlane.xlu0 %877
        %v879 = vadd.f32 %v517, %v518
        %880 = vadd.xlane.f32.xlu0 %v879
        %v881 = vpop.xlane.xlu0 %880
        %v882 = vadd.f32 %v519, %v520
        %883 = vadd.xlane.f32.xlu0 %v882
        %v884 = vpop.xlane.xlu0 %883
        %v885 = vadd.f32 %v521, %v522
        %886 = vadd.xlane.f32.xlu0 %v885
        %v887 = vpop.xlane.xlu0 %886
        %v888 = vadd.f32 %v523, %v524
        %889 = vadd.xlane.f32.xlu0 %v888
        %v890 = vpop.xlane.xlu0 %889
        %v891 = vadd.f32 %v525, %v526
        %892 = vadd.xlane.f32.xlu0 %v891
        %v893 = vpop.xlane.xlu0 %892
        %v894 = vadd.f32 %v527, %v528
        %895 = vadd.xlane.f32.xlu0 %v894
        %v896 = vpop.xlane.xlu0 %895
        %v897 = vadd.f32 %v529, %v530
        %898 = vadd.xlane.f32.xlu0 %v897
        %v899 = vpop.xlane.xlu0 %898
        %v900 = vadd.f32 %v531, %v532
        %901 = vadd.xlane.f32.xlu0 %v900
        %v902 = vpop.xlane.xlu0 %901
        %v903 = vadd.f32 %v533, %v534
        %904 = vadd.xlane.f32.xlu0 %v903
        %v905 = vpop.xlane.xlu0 %904
        %v906 = vadd.f32 %v535, %v536
        %907 = vadd.xlane.f32.xlu0 %v906
        %v908 = vpop.xlane.xlu0 %907
        %v909 = vadd.f32 %v537, %v538
        %910 = vadd.xlane.f32.xlu0 %v909
        %v911 = vpop.xlane.xlu0 %910
        %v912 = vadd.f32 %v539, %v540
        %913 = vadd.xlane.f32.xlu0 %v912
        %v914 = vpop.xlane.xlu0 %913
        %v915 = vadd.f32 %v541, %v542
        %916 = vadd.xlane.f32.xlu0 %v915
        %v917 = vpop.xlane.xlu0 %916
        %v918 = vadd.f32 %v543, %v544
        %919 = vadd.xlane.f32.xlu0 %v918
        %v920 = vpop.xlane.xlu0 %919
        %v921 = vadd.f32 %v545, %v546
        %922 = vadd.xlane.f32.xlu0 %v921
        %v923 = vpop.xlane.xlu0 %922
        %v924 = vadd.f32 %v547, %v548
        %925 = vadd.xlane.f32.xlu0 %v924
        %v926 = vpop.xlane.xlu0 %925
        %v927 = vadd.f32 %v549, %v550
        %928 = vadd.xlane.f32.xlu0 %v927
        %v929 = vpop.xlane.xlu0 %928
        %v930 = vadd.f32 %v551, %v552
        %931 = vadd.xlane.f32.xlu0 %v930
        %v932 = vpop.xlane.xlu0 %931
        %v933 = vadd.f32 %v553, %v554
        %934 = vadd.xlane.f32.xlu0 %v933
        %v935 = vpop.xlane.xlu0 %934
        %v936 = vadd.f32 %v555, %v556
        %937 = vadd.xlane.f32.xlu0 %v936
        %v938 = vpop.xlane.xlu0 %937
        %v939 = vadd.f32 %v557, %v558
        %940 = vadd.xlane.f32.xlu0 %v939
        %v941 = vpop.xlane.xlu0 %940
        %v942 = vadd.f32 %v559, %v560
        %943 = vadd.xlane.f32.xlu0 %v942
        %v944 = vpop.xlane.xlu0 %943
        %v1073 = vlaneseq
        %v1074 = vand.u32 %v1073, 127
        %v1075 = vlaneseq
        %v1076 = vshrl.u32 %v1075, 7
        %v1077 = vsub.s32 %v1074, %v1076
        %v1078 = vrot.slane %v563, %v1077
        %v1079 = vadd.s32 %v1074, 4294967288
        %v1080 = vlaneseq
        %v1081 = vshrl.u32 %v1080, 7
        %v1082 = vsub.s32 %v1079, %v1081
        %v1083 = vrot.slane %v566, %v1082
        %vm1084 = vcmask 130112
        %v1085 = vsel %vm1084, %v1083, %v1078
        %v1086 = vadd.s32 %v1074, 4294967280
        %v1087 = vlaneseq
        %v1088 = vshrl.u32 %v1087, 7
        %v1089 = vsub.s32 %v1086, %v1088
        %v1090 = vrot.slane %v569, %v1089
        %vm1091 = vcmask 195712
        %v1092 = vsel %vm1091, %v1090, %v1085
        %v1093 = vadd.s32 %v1074, 4294967272
        %v1094 = vlaneseq
        %v1095 = vshrl.u32 %v1094, 7
        %v1096 = vsub.s32 %v1093, %v1095
        %v1097 = vrot.slane %v572, %v1096
        %vm1098 = vcmask 261312
        %v1099 = vsel %vm1098, %v1097, %v1092
        %v1100 = vadd.s32 %v1074, 4294967264
        %v1101 = vlaneseq
        %v1102 = vshrl.u32 %v1101, 7
        %v1103 = vsub.s32 %v1100, %v1102
        %v1104 = vrot.slane %v575, %v1103
        %vm1105 = vcmask 326912
        %v1106 = vsel %vm1105, %v1104, %v1099
        %v1107 = vadd.s32 %v1074, 4294967256
        %v1108 = vlaneseq
        %v1109 = vshrl.u32 %v1108, 7
        %v1110 = vsub.s32 %v1107, %v1109
        %v1111 = vrot.slane %v578, %v1110
        %vm1112 = vcmask 392512
        %v1113 = vsel %vm1112, %v1111, %v1106
        %v1114 = vadd.s32 %v1074, 4294967248
        %v1115 = vlaneseq
        %v1116 = vshrl.u32 %v1115, 7
        %v1117 = vsub.s32 %v1114, %v1116
        %v1118 = vrot.slane %v581, %v1117
        %vm1119 = vcmask 458112
        %v1120 = vsel %vm1119, %v1118, %v1113
        %v1121 = vadd.s32 %v1074, 4294967240
        %v1122 = vlaneseq
        %v1123 = vshrl.u32 %v1122, 7
        %v1124 = vsub.s32 %v1121, %v1123
        %v1125 = vrot.slane %v584, %v1124
        %vm1126 = vcmask 523712
        %v1127 = vsel %vm1126, %v1125, %v1120
        %v1128 = vadd.s32 %v1074, 4294967232
        %v1129 = vlaneseq
        %v1130 = vshrl.u32 %v1129, 7
        %v1131 = vsub.s32 %v1128, %v1130
        %v1132 = vrot.slane %v587, %v1131
        %vm1133 = vcmask 589312
        %v1134 = vsel %vm1133, %v1132, %v1127
        %v1135 = vadd.s32 %v1074, 4294967224
        %v1136 = vlaneseq
        %v1137 = vshrl.u32 %v1136, 7
        %v1138 = vsub.s32 %v1135, %v1137
        %v1139 = vrot.slane %v590, %v1138
        %vm1140 = vcmask 654912
        %v1141 = vsel %vm1140, %v1139, %v1134
        %v1142 = vadd.s32 %v1074, 4294967216
        %v1143 = vlaneseq
        %v1144 = vshrl.u32 %v1143, 7
        %v1145 = vsub.s32 %v1142, %v1144
        %v1146 = vrot.slane %v593, %v1145
        %vm1147 = vcmask 720512
        %v1148 = vsel %vm1147, %v1146, %v1141
        %v1149 = vadd.s32 %v1074, 4294967208
        %v1150 = vlaneseq
        %v1151 = vshrl.u32 %v1150, 7
        %v1152 = vsub.s32 %v1149, %v1151
        %v1153 = vrot.slane %v596, %v1152
        %vm1154 = vcmask 786112
        %v1155 = vsel %vm1154, %v1153, %v1148
        %v1156 = vadd.s32 %v1074, 4294967200
        %v1157 = vlaneseq
        %v1158 = vshrl.u32 %v1157, 7
        %v1159 = vsub.s32 %v1156, %v1158
        %v1160 = vrot.slane %v599, %v1159
        %vm1161 = vcmask 851712
        %v1162 = vsel %vm1161, %v1160, %v1155
        %v1163 = vadd.s32 %v1074, 4294967192
        %v1164 = vlaneseq
        %v1165 = vshrl.u32 %v1164, 7
        %v1166 = vsub.s32 %v1163, %v1165
        %v1167 = vrot.slane %v602, %v1166
        %vm1168 = vcmask 917312
        %v1169 = vsel %vm1168, %v1167, %v1162
        %v1170 = vadd.s32 %v1074, 4294967184
        %v1171 = vlaneseq
        %v1172 = vshrl.u32 %v1171, 7
        %v1173 = vsub.s32 %v1170, %v1172
        %v1174 = vrot.slane %v605, %v1173
        %vm1175 = vcmask 982912
        %v1176 = vsel %vm1175, %v1174, %v1169
        %v1177 = vadd.s32 %v1074, 4294967176
        %v1178 = vlaneseq
        %v1179 = vshrl.u32 %v1178, 7
        %v1180 = vsub.s32 %v1177, %v1179
        %v1181 = vrot.slane %v608, %v1180
        %vm1182 = vcmask 1048512
        %v1183 = vsel %vm1182, %v1181, %v1176
        %v1184 = vlaneseq
        %v1185 = vshrl.u32 %v1184, 7
        %v1186 = vsub.s32 %v1074, %v1185
        %v1187 = vrot.slane %v611, %v1186
        %v1188 = vlaneseq
        %v1189 = vshrl.u32 %v1188, 7
        %v1190 = vsub.s32 %v1079, %v1189
        %v1191 = vrot.slane %v614, %v1190
        %v1192 = vsel %vm1084, %v1191, %v1187
        %v1193 = vlaneseq
        %v1194 = vshrl.u32 %v1193, 7
        %v1195 = vsub.s32 %v1086, %v1194
        %v1196 = vrot.slane %v617, %v1195
        %v1197 = vsel %vm1091, %v1196, %v1192
        %v1198 = vlaneseq
        %v1199 = vshrl.u32 %v1198, 7
        %v1200 = vsub.s32 %v1093, %v1199
        %v1201 = vrot.slane %v620, %v1200
        %v1202 = vsel %vm1098, %v1201, %v1197
        %v1203 = vlaneseq
        %v1204 = vshrl.u32 %v1203, 7
        %v1205 = vsub.s32 %v1100, %v1204
        %v1206 = vrot.slane %v623, %v1205
        %v1207 = vsel %vm1105, %v1206, %v1202
        %v1208 = vlaneseq
        %v1209 = vshrl.u32 %v1208, 7
        %v1210 = vsub.s32 %v1107, %v1209
        %v1211 = vrot.slane %v626, %v1210
        %v1212 = vsel %vm1112, %v1211, %v1207
        %v1213 = vlaneseq
        %v1214 = vshrl.u32 %v1213, 7
        %v1215 = vsub.s32 %v1114, %v1214
        %v1216 = vrot.slane %v629, %v1215
        %v1217 = vsel %vm1119, %v1216, %v1212
        %v1218 = vlaneseq
        %v1219 = vshrl.u32 %v1218, 7
        %v1220 = vsub.s32 %v1121, %v1219
        %v1221 = vrot.slane %v632, %v1220
        %v1222 = vsel %vm1126, %v1221, %v1217
        %v1223 = vlaneseq
        %v1224 = vshrl.u32 %v1223, 7
        %v1225 = vsub.s32 %v1128, %v1224
        %v1226 = vrot.slane %v635, %v1225
        %v1227 = vsel %vm1133, %v1226, %v1222
        %v1228 = vlaneseq
        %v1229 = vshrl.u32 %v1228, 7
        %v1230 = vsub.s32 %v1135, %v1229
        %v1231 = vrot.slane %v638, %v1230
        %v1232 = vsel %vm1140, %v1231, %v1227
        %v1233 = vlaneseq
        %v1234 = vshrl.u32 %v1233, 7
        %v1235 = vsub.s32 %v1142, %v1234
        %v1236 = vrot.slane %v641, %v1235
        %v1237 = vsel %vm1147, %v1236, %v1232
        %v1238 = vlaneseq
        %v1239 = vshrl.u32 %v1238, 7
        %v1240 = vsub.s32 %v1149, %v1239
        %v1241 = vrot.slane %v644, %v1240
        %v1242 = vsel %vm1154, %v1241, %v1237
        %v1243 = vlaneseq
        %v1244 = vshrl.u32 %v1243, 7
        %v1245 = vsub.s32 %v1156, %v1244
        %v1246 = vrot.slane %v647, %v1245
        %v1247 = vsel %vm1161, %v1246, %v1242
        %v1248 = vlaneseq
        %v1249 = vshrl.u32 %v1248, 7
        %v1250 = vsub.s32 %v1163, %v1249
        %v1251 = vrot.slane %v650, %v1250
        %v1252 = vsel %vm1168, %v1251, %v1247
        %v1253 = vlaneseq
        %v1254 = vshrl.u32 %v1253, 7
        %v1255 = vsub.s32 %v1170, %v1254
        %v1256 = vrot.slane %v653, %v1255
        %v1257 = vsel %vm1175, %v1256, %v1252
        %v1258 = vlaneseq
        %v1259 = vshrl.u32 %v1258, 7
        %v1260 = vsub.s32 %v1177, %v1259
        %v1261 = vrot.slane %v656, %v1260
        %v1262 = vsel %vm1182, %v1261, %v1257
        %v1263 = vlaneseq
        %v1264 = vshrl.u32 %v1263, 7
        %v1265 = vsub.s32 %v1074, %v1264
        %v1266 = vrot.slane %v659, %v1265
        %v1267 = vlaneseq
        %v1268 = vshrl.u32 %v1267, 7
        %v1269 = vsub.s32 %v1079, %v1268
        %v1270 = vrot.slane %v662, %v1269
        %v1271 = vsel %vm1084, %v1270, %v1266
        %v1272 = vlaneseq
        %v1273 = vshrl.u32 %v1272, 7
        %v1274 = vsub.s32 %v1086, %v1273
        %v1275 = vrot.slane %v665, %v1274
        %v1276 = vsel %vm1091, %v1275, %v1271
        %v1277 = vlaneseq
        %v1278 = vshrl.u32 %v1277, 7
        %v1279 = vsub.s32 %v1093, %v1278
        %v1280 = vrot.slane %v668, %v1279
        %v1281 = vsel %vm1098, %v1280, %v1276
        %v1282 = vlaneseq
        %v1283 = vshrl.u32 %v1282, 7
        %v1284 = vsub.s32 %v1100, %v1283
        %v1285 = vrot.slane %v671, %v1284
        %v1286 = vsel %vm1105, %v1285, %v1281
        %v1287 = vlaneseq
        %v1288 = vshrl.u32 %v1287, 7
        %v1289 = vsub.s32 %v1107, %v1288
        %v1290 = vrot.slane %v674, %v1289
        %v1291 = vsel %vm1112, %v1290, %v1286
        %v1292 = vlaneseq
        %v1293 = vshrl.u32 %v1292, 7
        %v1294 = vsub.s32 %v1114, %v1293
        %v1295 = vrot.slane %v677, %v1294
        %v1296 = vsel %vm1119, %v1295, %v1291
        %v1297 = vlaneseq
        %v1298 = vshrl.u32 %v1297, 7
        %v1299 = vsub.s32 %v1121, %v1298
        %v1300 = vrot.slane %v680, %v1299
        %v1301 = vsel %vm1126, %v1300, %v1296
        %v1302 = vlaneseq
        %v1303 = vshrl.u32 %v1302, 7
        %v1304 = vsub.s32 %v1128, %v1303
        %v1305 = vrot.slane %v683, %v1304
        %v1306 = vsel %vm1133, %v1305, %v1301
        %v1307 = vlaneseq
        %v1308 = vshrl.u32 %v1307, 7
        %v1309 = vsub.s32 %v1135, %v1308
        %v1310 = vrot.slane %v686, %v1309
        %v1311 = vsel %vm1140, %v1310, %v1306
        %v1312 = vlaneseq
        %v1313 = vshrl.u32 %v1312, 7
        %v1314 = vsub.s32 %v1142, %v1313
        %v1315 = vrot.slane %v689, %v1314
        %v1316 = vsel %vm1147, %v1315, %v1311
        %v1317 = vlaneseq
        %v1318 = vshrl.u32 %v1317, 7
        %v1319 = vsub.s32 %v1149, %v1318
        %v1320 = vrot.slane %v692, %v1319
        %v1321 = vsel %vm1154, %v1320, %v1316
        %v1322 = vlaneseq
        %v1323 = vshrl.u32 %v1322, 7
        %v1324 = vsub.s32 %v1156, %v1323
        %v1325 = vrot.slane %v695, %v1324
        %v1326 = vsel %vm1161, %v1325, %v1321
        %v1327 = vlaneseq
        %v1328 = vshrl.u32 %v1327, 7
        %v1329 = vsub.s32 %v1163, %v1328
        %v1330 = vrot.slane %v698, %v1329
        %v1331 = vsel %vm1168, %v1330, %v1326
        %v1332 = vlaneseq
        %v1333 = vshrl.u32 %v1332, 7
        %v1334 = vsub.s32 %v1170, %v1333
        %v1335 = vrot.slane %v701, %v1334
        %v1336 = vsel %vm1175, %v1335, %v1331
        %v1337 = vlaneseq
        %v1338 = vshrl.u32 %v1337, 7
        %v1339 = vsub.s32 %v1177, %v1338
        %v1340 = vrot.slane %v704, %v1339
        %v1341 = vsel %vm1182, %v1340, %v1336
        %v1342 = vlaneseq
        %v1343 = vshrl.u32 %v1342, 7
        %v1344 = vsub.s32 %v1074, %v1343
        %v1345 = vrot.slane %v707, %v1344
        %v1346 = vlaneseq
        %v1347 = vshrl.u32 %v1346, 7
        %v1348 = vsub.s32 %v1079, %v1347
        %v1349 = vrot.slane %v710, %v1348
        %v1350 = vsel %vm1084, %v1349, %v1345
        %v1351 = vlaneseq
        %v1352 = vshrl.u32 %v1351, 7
        %v1353 = vsub.s32 %v1086, %v1352
        %v1354 = vrot.slane %v713, %v1353
        %v1355 = vsel %vm1091, %v1354, %v1350
        %v1356 = vlaneseq
        %v1357 = vshrl.u32 %v1356, 7
        %v1358 = vsub.s32 %v1093, %v1357
        %v1359 = vrot.slane %v716, %v1358
        %v1360 = vsel %vm1098, %v1359, %v1355
        %v1361 = vlaneseq
        %v1362 = vshrl.u32 %v1361, 7
        %v1363 = vsub.s32 %v1100, %v1362
        %v1364 = vrot.slane %v719, %v1363
        %v1365 = vsel %vm1105, %v1364, %v1360
        %v1366 = vlaneseq
        %v1367 = vshrl.u32 %v1366, 7
        %v1368 = vsub.s32 %v1107, %v1367
        %v1369 = vrot.slane %v722, %v1368
        %v1370 = vsel %vm1112, %v1369, %v1365
        %v1371 = vlaneseq
        %v1372 = vshrl.u32 %v1371, 7
        %v1373 = vsub.s32 %v1114, %v1372
        %v1374 = vrot.slane %v725, %v1373
        %v1375 = vsel %vm1119, %v1374, %v1370
        %v1376 = vlaneseq
        %v1377 = vshrl.u32 %v1376, 7
        %v1378 = vsub.s32 %v1121, %v1377
        %v1379 = vrot.slane %v728, %v1378
        %v1380 = vsel %vm1126, %v1379, %v1375
        %v1381 = vlaneseq
        %v1382 = vshrl.u32 %v1381, 7
        %v1383 = vsub.s32 %v1128, %v1382
        %v1384 = vrot.slane %v731, %v1383
        %v1385 = vsel %vm1133, %v1384, %v1380
        %v1386 = vlaneseq
        %v1387 = vshrl.u32 %v1386, 7
        %v1388 = vsub.s32 %v1135, %v1387
        %v1389 = vrot.slane %v734, %v1388
        %v1390 = vsel %vm1140, %v1389, %v1385
        %v1391 = vlaneseq
        %v1392 = vshrl.u32 %v1391, 7
        %v1393 = vsub.s32 %v1142, %v1392
        %v1394 = vrot.slane %v737, %v1393
        %v1395 = vsel %vm1147, %v1394, %v1390
        %v1396 = vlaneseq
        %v1397 = vshrl.u32 %v1396, 7
        %v1398 = vsub.s32 %v1149, %v1397
        %v1399 = vrot.slane %v740, %v1398
        %v1400 = vsel %vm1154, %v1399, %v1395
        %v1401 = vlaneseq
        %v1402 = vshrl.u32 %v1401, 7
        %v1403 = vsub.s32 %v1156, %v1402
        %v1404 = vrot.slane %v743, %v1403
        %v1405 = vsel %vm1161, %v1404, %v1400
        %v1406 = vlaneseq
        %v1407 = vshrl.u32 %v1406, 7
        %v1408 = vsub.s32 %v1163, %v1407
        %v1409 = vrot.slane %v746, %v1408
        %v1410 = vsel %vm1168, %v1409, %v1405
        %v1411 = vlaneseq
        %v1412 = vshrl.u32 %v1411, 7
        %v1413 = vsub.s32 %v1170, %v1412
        %v1414 = vrot.slane %v749, %v1413
        %v1415 = vsel %vm1175, %v1414, %v1410
        %v1416 = vlaneseq
        %v1417 = vshrl.u32 %v1416, 7
        %v1418 = vsub.s32 %v1177, %v1417
        %v1419 = vrot.slane %v752, %v1418
        %v1420 = vsel %vm1182, %v1419, %v1415
        %v1421 = vlaneseq
        %v1422 = vshrl.u32 %v1421, 7
        %v1423 = vsub.s32 %v1074, %v1422
        %v1424 = vrot.slane %v755, %v1423
        %v1425 = vlaneseq
        %v1426 = vshrl.u32 %v1425, 7
        %v1427 = vsub.s32 %v1079, %v1426
        %v1428 = vrot.slane %v758, %v1427
        %v1429 = vsel %vm1084, %v1428, %v1424
        %v1430 = vlaneseq
        %v1431 = vshrl.u32 %v1430, 7
        %v1432 = vsub.s32 %v1086, %v1431
        %v1433 = vrot.slane %v761, %v1432
        %v1434 = vsel %vm1091, %v1433, %v1429
        %v1435 = vlaneseq
        %v1436 = vshrl.u32 %v1435, 7
        %v1437 = vsub.s32 %v1093, %v1436
        %v1438 = vrot.slane %v764, %v1437
        %v1439 = vsel %vm1098, %v1438, %v1434
        %v1440 = vlaneseq
        %v1441 = vshrl.u32 %v1440, 7
        %v1442 = vsub.s32 %v1100, %v1441
        %v1443 = vrot.slane %v767, %v1442
        %v1444 = vsel %vm1105, %v1443, %v1439
        %v1445 = vlaneseq
        %v1446 = vshrl.u32 %v1445, 7
        %v1447 = vsub.s32 %v1107, %v1446
        %v1448 = vrot.slane %v770, %v1447
        %v1449 = vsel %vm1112, %v1448, %v1444
        %v1450 = vlaneseq
        %v1451 = vshrl.u32 %v1450, 7
        %v1452 = vsub.s32 %v1114, %v1451
        %v1453 = vrot.slane %v773, %v1452
        %v1454 = vsel %vm1119, %v1453, %v1449
        %v1455 = vlaneseq
        %v1456 = vshrl.u32 %v1455, 7
        %v1457 = vsub.s32 %v1121, %v1456
        %v1458 = vrot.slane %v776, %v1457
        %v1459 = vsel %vm1126, %v1458, %v1454
        %v1460 = vlaneseq
        %v1461 = vshrl.u32 %v1460, 7
        %v1462 = vsub.s32 %v1128, %v1461
        %v1463 = vrot.slane %v779, %v1462
        %v1464 = vsel %vm1133, %v1463, %v1459
        %v1465 = vlaneseq
        %v1466 = vshrl.u32 %v1465, 7
        %v1467 = vsub.s32 %v1135, %v1466
        %v1468 = vrot.slane %v782, %v1467
        %v1469 = vsel %vm1140, %v1468, %v1464
        %v1470 = vlaneseq
        %v1471 = vshrl.u32 %v1470, 7
        %v1472 = vsub.s32 %v1142, %v1471
        %v1473 = vrot.slane %v785, %v1472
        %v1474 = vsel %vm1147, %v1473, %v1469
        %v1475 = vlaneseq
        %v1476 = vshrl.u32 %v1475, 7
        %v1477 = vsub.s32 %v1149, %v1476
        %v1478 = vrot.slane %v788, %v1477
        %v1479 = vsel %vm1154, %v1478, %v1474
        %v1480 = vlaneseq
        %v1481 = vshrl.u32 %v1480, 7
        %v1482 = vsub.s32 %v1156, %v1481
        %v1483 = vrot.slane %v791, %v1482
        %v1484 = vsel %vm1161, %v1483, %v1479
        %v1485 = vlaneseq
        %v1486 = vshrl.u32 %v1485, 7
        %v1487 = vsub.s32 %v1163, %v1486
        %v1488 = vrot.slane %v794, %v1487
        %v1489 = vsel %vm1168, %v1488, %v1484
        %v1490 = vlaneseq
        %v1491 = vshrl.u32 %v1490, 7
        %v1492 = vsub.s32 %v1170, %v1491
        %v1493 = vrot.slane %v797, %v1492
        %v1494 = vsel %vm1175, %v1493, %v1489
        %v1495 = vlaneseq
        %v1496 = vshrl.u32 %v1495, 7
        %v1497 = vsub.s32 %v1177, %v1496
        %v1498 = vrot.slane %v800, %v1497
        %v1499 = vsel %vm1182, %v1498, %v1494
        %v1500 = vlaneseq
        %v1501 = vshrl.u32 %v1500, 7
        %v1502 = vsub.s32 %v1074, %v1501
        %v1503 = vrot.slane %v803, %v1502
        %v1504 = vlaneseq
        %v1505 = vshrl.u32 %v1504, 7
        %v1506 = vsub.s32 %v1079, %v1505
        %v1507 = vrot.slane %v806, %v1506
        %v1508 = vsel %vm1084, %v1507, %v1503
        %v1509 = vlaneseq
        %v1510 = vshrl.u32 %v1509, 7
        %v1511 = vsub.s32 %v1086, %v1510
        %v1512 = vrot.slane %v809, %v1511
        %v1513 = vsel %vm1091, %v1512, %v1508
        %v1514 = vlaneseq
        %v1515 = vshrl.u32 %v1514, 7
        %v1516 = vsub.s32 %v1093, %v1515
        %v1517 = vrot.slane %v812, %v1516
        %v1518 = vsel %vm1098, %v1517, %v1513
        %v1519 = vlaneseq
        %v1520 = vshrl.u32 %v1519, 7
        %v1521 = vsub.s32 %v1100, %v1520
        %v1522 = vrot.slane %v815, %v1521
        %v1523 = vsel %vm1105, %v1522, %v1518
        %v1524 = vlaneseq
        %v1525 = vshrl.u32 %v1524, 7
        %v1526 = vsub.s32 %v1107, %v1525
        %v1527 = vrot.slane %v818, %v1526
        %v1528 = vsel %vm1112, %v1527, %v1523
        %v1529 = vlaneseq
        %v1530 = vshrl.u32 %v1529, 7
        %v1531 = vsub.s32 %v1114, %v1530
        %v1532 = vrot.slane %v821, %v1531
        %v1533 = vsel %vm1119, %v1532, %v1528
        %v1534 = vlaneseq
        %v1535 = vshrl.u32 %v1534, 7
        %v1536 = vsub.s32 %v1121, %v1535
        %v1537 = vrot.slane %v824, %v1536
        %v1538 = vsel %vm1126, %v1537, %v1533
        %v1539 = vlaneseq
        %v1540 = vshrl.u32 %v1539, 7
        %v1541 = vsub.s32 %v1128, %v1540
        %v1542 = vrot.slane %v827, %v1541
        %v1543 = vsel %vm1133, %v1542, %v1538
        %v1544 = vlaneseq
        %v1545 = vshrl.u32 %v1544, 7
        %v1546 = vsub.s32 %v1135, %v1545
        %v1547 = vrot.slane %v830, %v1546
        %v1548 = vsel %vm1140, %v1547, %v1543
        %v1549 = vlaneseq
        %v1550 = vshrl.u32 %v1549, 7
        %v1551 = vsub.s32 %v1142, %v1550
        %v1552 = vrot.slane %v833, %v1551
        %v1553 = vsel %vm1147, %v1552, %v1548
        %v1554 = vlaneseq
        %v1555 = vshrl.u32 %v1554, 7
        %v1556 = vsub.s32 %v1149, %v1555
        %v1557 = vrot.slane %v836, %v1556
        %v1558 = vsel %vm1154, %v1557, %v1553
        %v1559 = vlaneseq
        %v1560 = vshrl.u32 %v1559, 7
        %v1561 = vsub.s32 %v1156, %v1560
        %v1562 = vrot.slane %v839, %v1561
        %v1563 = vsel %vm1161, %v1562, %v1558
        %v1564 = vlaneseq
        %v1565 = vshrl.u32 %v1564, 7
        %v1566 = vsub.s32 %v1163, %v1565
        %v1567 = vrot.slane %v842, %v1566
        %v1568 = vsel %vm1168, %v1567, %v1563
        %v1569 = vlaneseq
        %v1570 = vshrl.u32 %v1569, 7
        %v1571 = vsub.s32 %v1170, %v1570
        %v1572 = vrot.slane %v845, %v1571
        %v1573 = vsel %vm1175, %v1572, %v1568
        %v1574 = vlaneseq
        %v1575 = vshrl.u32 %v1574, 7
        %v1576 = vsub.s32 %v1177, %v1575
        %v1577 = vrot.slane %v848, %v1576
        %v1578 = vsel %vm1182, %v1577, %v1573
        %v1579 = vlaneseq
        %v1580 = vshrl.u32 %v1579, 7
        %v1581 = vsub.s32 %v1074, %v1580
        %v1582 = vrot.slane %v851, %v1581
        %v1583 = vlaneseq
        %v1584 = vshrl.u32 %v1583, 7
        %v1585 = vsub.s32 %v1079, %v1584
        %v1586 = vrot.slane %v854, %v1585
        %v1587 = vsel %vm1084, %v1586, %v1582
        %v1588 = vlaneseq
        %v1589 = vshrl.u32 %v1588, 7
        %v1590 = vsub.s32 %v1086, %v1589
        %v1591 = vrot.slane %v857, %v1590
        %v1592 = vsel %vm1091, %v1591, %v1587
        %v1593 = vlaneseq
        %v1594 = vshrl.u32 %v1593, 7
        %v1595 = vsub.s32 %v1093, %v1594
        %v1596 = vrot.slane %v860, %v1595
        %v1597 = vsel %vm1098, %v1596, %v1592
        %v1598 = vlaneseq
        %v1599 = vshrl.u32 %v1598, 7
        %v1600 = vsub.s32 %v1100, %v1599
        %v1601 = vrot.slane %v863, %v1600
        %v1602 = vsel %vm1105, %v1601, %v1597
        %v1603 = vlaneseq
        %v1604 = vshrl.u32 %v1603, 7
        %v1605 = vsub.s32 %v1107, %v1604
        %v1606 = vrot.slane %v866, %v1605
        %v1607 = vsel %vm1112, %v1606, %v1602
        %v1608 = vlaneseq
        %v1609 = vshrl.u32 %v1608, 7
        %v1610 = vsub.s32 %v1114, %v1609
        %v1611 = vrot.slane %v869, %v1610
        %v1612 = vsel %vm1119, %v1611, %v1607
        %v1613 = vlaneseq
        %v1614 = vshrl.u32 %v1613, 7
        %v1615 = vsub.s32 %v1121, %v1614
        %v1616 = vrot.slane %v872, %v1615
        %v1617 = vsel %vm1126, %v1616, %v1612
        %v1618 = vlaneseq
        %v1619 = vshrl.u32 %v1618, 7
        %v1620 = vsub.s32 %v1128, %v1619
        %v1621 = vrot.slane %v875, %v1620
        %v1622 = vsel %vm1133, %v1621, %v1617
        %v1623 = vlaneseq
        %v1624 = vshrl.u32 %v1623, 7
        %v1625 = vsub.s32 %v1135, %v1624
        %v1626 = vrot.slane %v878, %v1625
        %v1627 = vsel %vm1140, %v1626, %v1622
        %v1628 = vlaneseq
        %v1629 = vshrl.u32 %v1628, 7
        %v1630 = vsub.s32 %v1142, %v1629
        %v1631 = vrot.slane %v881, %v1630
        %v1632 = vsel %vm1147, %v1631, %v1627
        %v1633 = vlaneseq
        %v1634 = vshrl.u32 %v1633, 7
        %v1635 = vsub.s32 %v1149, %v1634
        %v1636 = vrot.slane %v884, %v1635
        %v1637 = vsel %vm1154, %v1636, %v1632
        %v1638 = vlaneseq
        %v1639 = vshrl.u32 %v1638, 7
        %v1640 = vsub.s32 %v1156, %v1639
        %v1641 = vrot.slane %v887, %v1640
        %v1642 = vsel %vm1161, %v1641, %v1637
        %v1643 = vlaneseq
        %v1644 = vshrl.u32 %v1643, 7
        %v1645 = vsub.s32 %v1163, %v1644
        %v1646 = vrot.slane %v890, %v1645
        %v1647 = vsel %vm1168, %v1646, %v1642
        %v1648 = vlaneseq
        %v1649 = vshrl.u32 %v1648, 7
        %v1650 = vsub.s32 %v1170, %v1649
        %v1651 = vrot.slane %v893, %v1650
        %v1652 = vsel %vm1175, %v1651, %v1647
        %v1653 = vlaneseq
        %v1654 = vshrl.u32 %v1653, 7
        %v1655 = vsub.s32 %v1177, %v1654
        %v1656 = vrot.slane %v896, %v1655
        %v1657 = vsel %vm1182, %v1656, %v1652
        %v1658 = vlaneseq
        %v1659 = vshrl.u32 %v1658, 7
        %v1660 = vsub.s32 %v1074, %v1659
        %v1661 = vrot.slane %v899, %v1660
        %v1662 = vlaneseq
        %v1663 = vshrl.u32 %v1662, 7
        %v1664 = vsub.s32 %v1079, %v1663
        %v1665 = vrot.slane %v902, %v1664
        %v1666 = vsel %vm1084, %v1665, %v1661
        %v1667 = vlaneseq
        %v1668 = vshrl.u32 %v1667, 7
        %v1669 = vsub.s32 %v1086, %v1668
        %v1670 = vrot.slane %v905, %v1669
        %v1671 = vsel %vm1091, %v1670, %v1666
        %v1672 = vlaneseq
        %v1673 = vshrl.u32 %v1672, 7
        %v1674 = vsub.s32 %v1093, %v1673
        %v1675 = vrot.slane %v908, %v1674
        %v1676 = vsel %vm1098, %v1675, %v1671
        %v1677 = vlaneseq
        %v1678 = vshrl.u32 %v1677, 7
        %v1679 = vsub.s32 %v1100, %v1678
        %v1680 = vrot.slane %v911, %v1679
        %v1681 = vsel %vm1105, %v1680, %v1676
        %v1682 = vlaneseq
        %v1683 = vshrl.u32 %v1682, 7
        %v1684 = vsub.s32 %v1107, %v1683
        %v1685 = vrot.slane %v914, %v1684
        %v1686 = vsel %vm1112, %v1685, %v1681
        %v1687 = vlaneseq
        %v1688 = vshrl.u32 %v1687, 7
        %v1689 = vsub.s32 %v1114, %v1688
        %v1690 = vrot.slane %v917, %v1689
        %v1691 = vsel %vm1119, %v1690, %v1686
        %v1692 = vlaneseq
        %v1693 = vshrl.u32 %v1692, 7
        %v1694 = vsub.s32 %v1121, %v1693
        %v1695 = vrot.slane %v920, %v1694
        %v1696 = vsel %vm1126, %v1695, %v1691
        %v1697 = vlaneseq
        %v1698 = vshrl.u32 %v1697, 7
        %v1699 = vsub.s32 %v1128, %v1698
        %v1700 = vrot.slane %v923, %v1699
        %v1701 = vsel %vm1133, %v1700, %v1696
        %v1702 = vlaneseq
        %v1703 = vshrl.u32 %v1702, 7
        %v1704 = vsub.s32 %v1135, %v1703
        %v1705 = vrot.slane %v926, %v1704
        %v1706 = vsel %vm1140, %v1705, %v1701
        %v1707 = vlaneseq
        %v1708 = vshrl.u32 %v1707, 7
        %v1709 = vsub.s32 %v1142, %v1708
        %v1710 = vrot.slane %v929, %v1709
        %v1711 = vsel %vm1147, %v1710, %v1706
        %v1712 = vlaneseq
        %v1713 = vshrl.u32 %v1712, 7
        %v1714 = vsub.s32 %v1149, %v1713
        %v1715 = vrot.slane %v932, %v1714
        %v1716 = vsel %vm1154, %v1715, %v1711
        %v1717 = vlaneseq
        %v1718 = vshrl.u32 %v1717, 7
        %v1719 = vsub.s32 %v1156, %v1718
        %v1720 = vrot.slane %v935, %v1719
        %v1721 = vsel %vm1161, %v1720, %v1716
        %v1722 = vlaneseq
        %v1723 = vshrl.u32 %v1722, 7
        %v1724 = vsub.s32 %v1163, %v1723
        %v1725 = vrot.slane %v938, %v1724
        %v1726 = vsel %vm1168, %v1725, %v1721
        %v1727 = vlaneseq
        %v1728 = vshrl.u32 %v1727, 7
        %v1729 = vsub.s32 %v1170, %v1728
        %v1730 = vrot.slane %v941, %v1729
        %v1731 = vsel %vm1175, %v1730, %v1726
        %v1732 = vlaneseq
        %v1733 = vshrl.u32 %v1732, 7
        %v1734 = vsub.s32 %v1177, %v1733
        %v1735 = vrot.slane %v944, %v1734
        %v1736 = vsel %vm1182, %v1735, %v1731
        %vm1737 = vcmask 1041409
        %v1738 = vsel %vm1737, %v1262, %v1183
        %vm1739 = vcmask 1042434
        %v1740 = vsel %vm1739, %v1341, %v1738
        %vm1741 = vcmask 1043459
        %v1742 = vsel %vm1741, %v1420, %v1740
        %vm1743 = vcmask 1044484
        %v1744 = vsel %vm1743, %v1499, %v1742
        %vm1745 = vcmask 1045509
        %v1746 = vsel %vm1745, %v1578, %v1744
        %vm1747 = vcmask 1046534
        %v1748 = vsel %vm1747, %v1657, %v1746
        %vm1749 = vcmask 1047559
        %v1750 = vsel %vm1749, %v1736, %v1748
        %v1752 = vadd.f32 %v304, %v1750
        %1753 = vst [vmem:[#allocation2] sm:$0xff] %v1752
        // Predicated region
        $region57: #{tpu_custom_call.1} parent=35 // pred_check
          %p1754 = pneg %p299
        $region58: #{tpu_custom_call.1} parent=35 // pred_check_branch
          %1756 = sbr.rel (%p1754) target = $region60
        $region59: #{tpu_custom_call.1} parent=35 // pred_region
          %v1757 = vld [vmem:[#allocation2] sm:$0xff]
          %v1758 = vld [vmem:[%s259] sm:$0xff]
          %v1759 = vmul.f32 %v1757, %v1758
          %v1760 = vld [vmem:[#allocation8] sm:$0xff]
          %v1761 = vld [vmem:[#allocation8 + $0x8] sm:$0xff]
          %v1762 = vld [vmem:[#allocation8 + $0x10] sm:$0xff]
          %v1763 = vld [vmem:[#allocation8 + $0x18] sm:$0xff]
          %v1764 = vld [vmem:[#allocation8 + $0x20] sm:$0xff]
          %v1765 = vld [vmem:[#allocation8 + $0x28] sm:$0xff]
          %v1766 = vld [vmem:[#allocation8 + $0x30] sm:$0xff]
          %v1767 = vld [vmem:[#allocation8 + $0x38] sm:$0xff]
          %v1768 = vld [vmem:[#allocation8 + $0x40] sm:$0xff]
          %v1769 = vld [vmem:[#allocation8 + $0x48] sm:$0xff]
          %v1770 = vld [vmem:[#allocation8 + $0x50] sm:$0xff]
          %v1771 = vld [vmem:[#allocation8 + $0x58] sm:$0xff]
          %v1772 = vld [vmem:[#allocation8 + $0x60] sm:$0xff]
          %v1773 = vld [vmem:[#allocation8 + $0x68] sm:$0xff]
          %v1774 = vld [vmem:[#allocation8 + $0x70] sm:$0xff]
          %v1775 = vld [vmem:[#allocation8 + $0x78] sm:$0xff]
          %v1776 = vld [vmem:[#allocation9] sm:$0x1]
          %v1778 = vlaneseq
          %v1779 = vshrl.u32 %v1778, 7
          %v1780 = vsub.s32 0, %v1779
          %v1781 = vrot.slane %v1776, %v1780
          %1783 = vmatprep.subr.mxu0 0.0
          %1784 = vmatpush1.msra.mxu0 %v1775
          %1785 = vmatprep.subr.mxu0 0.0
          %1786 = vmatpush1.msra.mxu0 %v1774
          %1787 = vmatprep.subr.mxu0 0.0
          %1788 = vmatpush1.msra.mxu0 %v1773
          %1789 = vmatprep.subr.mxu0 0.0
          %1790 = vmatpush1.msra.mxu0 %v1772
          %1791 = vmatprep.subr.mxu0 0.0
          %1792 = vmatpush1.msra.mxu0 %v1771
          %1793 = vmatprep.subr.mxu0 0.0
          %1794 = vmatpush1.msra.mxu0 %v1770
          %1795 = vmatprep.subr.mxu0 0.0
          %1796 = vmatpush1.msra.mxu0 %v1769
          %1797 = vmatprep.subr.mxu0 0.0
          %1798 = vmatpush1.msra.mxu0 %v1768
          %1799 = vmatprep.subr.mxu0 0.0
          %1800 = vmatpush1.msra.mxu0 %v1767
          %1801 = vmatprep.subr.mxu0 0.0
          %1802 = vmatpush1.msra.mxu0 %v1766
          %1803 = vmatprep.subr.mxu0 0.0
          %1804 = vmatpush1.msra.mxu0 %v1765
          %1805 = vmatprep.subr.mxu0 0.0
          %1806 = vmatpush1.msra.mxu0 %v1764
          %1807 = vmatprep.subr.mxu0 0.0
          %1808 = vmatpush1.msra.mxu0 %v1763
          %1809 = vmatprep.subr.mxu0 0.0
          %1810 = vmatpush1.msra.mxu0 %v1762
          %1811 = vmatprep.subr.mxu0 0.0
          %1812 = vmatpush1.msra.mxu0 %v1761
          %1813 = vmatprep.subr.mxu0 0.0
          %1814 = vmatpush1.msra.mxu0 %v1760
          %1815 = vmatprep.subr.mxu0 0.0
          %1816 = vmatpush2.msra.mxu0 0.0
          %1817 = vmatprep.subr.mxu0 0.0
          %1818 = vmatpush2.msra.mxu0 0.0
          %1819 = vmatprep.subr.mxu0 0.0
          %1820 = vmatpush2.msra.mxu0 0.0
          %1821 = vmatprep.subr.mxu0 0.0
          %1822 = vmatpush2.msra.mxu0 0.0
          %1823 = vmatprep.subr.mxu0 0.0
          %1824 = vmatpush2.msra.mxu0 0.0
          %1825 = vmatprep.subr.mxu0 0.0
          %1826 = vmatpush2.msra.mxu0 0.0
          %1827 = vmatprep.subr.mxu0 0.0
          %1828 = vmatpush2.msra.mxu0 0.0
          %1829 = vmatprep.subr.mxu0 0.0
          %1830 = vmatpush2.msra.mxu0 0.0
          %1831 = vmatprep.subr.mxu0 0.0
          %1832 = vmatpush2.msra.mxu0 0.0
          %1833 = vmatprep.subr.mxu0 0.0
          %1834 = vmatpush2.msra.mxu0 0.0
          %1835 = vmatprep.subr.mxu0 0.0
          %1836 = vmatpush2.msra.mxu0 0.0
          %1837 = vmatprep.subr.mxu0 0.0
          %1838 = vmatpush2.msra.mxu0 0.0
          %1839 = vmatprep.subr.mxu0 0.0
          %1840 = vmatpush2.msra.mxu0 0.0
          %1841 = vmatprep.subr.mxu0 0.0
          %1842 = vmatpush2.msra.mxu0 0.0
          %1843 = vmatprep.subr.mxu0 0.0
          %1844 = vmatpush2.msra.mxu0 0.0
          %1845 = vmatprep.subr.mxu0 0.0
          %1846 = vmatpush2.msra.mxu0 0.0
          %1847 = vmatprep.mubr.f32.mxu0 0.0
          %1848 = vmatmul.mubr.f32.gmra.mxu0 %v1759
          %v1849 = vpop.f32.mrf.mxu0
          %v1850 = vadd.f32 %v1781, %v1849
          %v1851 = vpop.f32.mrf.mxu0
          %1852 = vdwg.mxu0
          %1853 = vst [vmem:[%s296] sm:$0xff] %v1850
        $region60: #{tpu_custom_call.1} parent=35 // pred_fallthru
          _
        %s1854 = sand.u32 %s141, 1
        %s1855 = scalar_lea.sflag [#allocation5], %s1854
        %s1856 = sand.u32 %s141, 1
        %s1857 = smul.addr %s1856, 8
        %s1858 = scalar_lea.vmem [#allocation11], %s1857
        // Predicated region
        $region61: #{tpu_custom_call.1} parent=35 // pred_check
          %p1859 = pneg %p151
        $region62: #{tpu_custom_call.1} parent=35 // pred_check_branch
          %1861 = sbr.rel (%p1859) target = $region64
        $region63: #{tpu_custom_call.1} parent=35 // pred_region
          %s1863 = ssub.s32 128, 128
          %1864 = vsyncadd %s1855, %s1863
          %s1865 = smul.addr %s29, 128
          %s1866 = scalar_lea.hbm %s4, %s1865
          %s1868 = sshll.u32 %s1858, 4
          %s1869 = int_to_ptr.vmem [resolvable:$true] %s1868
          %1871 = dma.vmem_to_hbm [thread:$0]  %s1869, 128, %s1866, %s1855
        $region64: #{tpu_custom_call.1} parent=35 // pred_fallthru
          _
      $region36: #{tpu_custom_call.1} parent=5 // pred_fallthru
        _
      %p1872 = scmp.le.s32.totalorder 2, %s20
      // Predicated region
      $region65: #{tpu_custom_call.1} parent=5 // pred_check
        %p1873 = pneg %p1872
      $region66: #{tpu_custom_call.1} parent=5 // pred_check_branch
        %1875 = sbr.rel (%p1873) target = $region68
      $region67: #{tpu_custom_call.1} parent=5 // pred_region
        %s1876 = ssub.s32 %s20, 2
        // Predicated region
        $region69: #{tpu_custom_call.1} parent=67 // pred_check
          %p1877 = pneg %p157
        $region70: #{tpu_custom_call.1} parent=67 // pred_check_branch
          %1879 = sbr.rel (%p1877) target = $region72
        $region71: #{tpu_custom_call.1} parent=67 // pred_region
          %s1880 = sand.u32 %s142, 1
          %s1881 = scalar_lea.sflag [#allocation5], %s1880
          %s1882 = sand.u32 %s142, 1
          %s1883 = smul.addr %s1882, 8
          %s1884 = scalar_lea.vmem [#allocation11], %s1883
          %1885 = dma.done %s1881, 128
        $region72: #{tpu_custom_call.1} parent=67 // pred_fallthru
          _
      $region68: #{tpu_custom_call.1} parent=5 // pred_fallthru
        _
    $region6: #{tpu_custom_call.1} parent=1 // loop_footer
      %s24 = sadd.s32 1, %s20
    $region7: #{tpu_custom_call.1} parent=1 // loop_footer_branch
      %19 = sbr.rel target = $region3
    $region8: #{tpu_custom_call.1} parent=1 // loop_exit
      _
    %1886 = vsyncpa [#allocation4], 1
    %s1887 = scalar_lea.sflag [#allocation4], 1
    %1888 = vsyncpa %s1887, 1
    %1889 = vsyncpa [#allocation7], 1
    %s1890 = scalar_lea.sflag [#allocation7], 1
    %1891 = vsyncpa %s1890, 1
    %1892 = vsyncpa [#allocation10], 1
    %1893 = vsyncpa [#allocation5], 1
    %s1894 = scalar_lea.sflag [#allocation5], 1
    %1895 = vsyncpa %s1894, 1

</llo_original>
